<compile_context>
chip_gen: v7x
topology: tpu7x:2x2x1
jax: 0.10.0
libtpu: 0.0.40
codegen_flags: <defaults>
</compile_context>

<pallas_src>
import functools

import jax
import jax.numpy as jnp
from jax.experimental import pallas as pl
from jax.experimental.pallas import tpu as pltpu


# ----------------------------------------------------------------------------
# Kernel: one transformer layer per grid step along the depth axis; the
# residual stream for the current batch tile lives in the output block o_ref.
# ----------------------------------------------------------------------------
def _transformer_kernel(x_ref,
                        g1_ref, bt1_ref,           # LayerNorm 1 gamma/beta   [1, D]
                        wqkv_ref,                  # QKV projection (no bias) [D, 3*inner] bf16
                        wout_ref, bout_ref,        # attention out proj       [inner, D] bf16, [1, D]
                        g2_ref, bt2_ref,           # LayerNorm 2 gamma/beta   [1, D]
                        w1_ref, b1_ref,            # MLP fc1                  [D, mlp] bf16, [1, mlp]
                        w2_ref, b2_ref,            # MLP fc2                  [mlp, D] bf16, [1, D]
                        o_ref,                     # output == resident residual  [bb, N, D] f32
                        *, heads, dim_head, use_approx_gelu):
    bb, n, d = o_ref.shape
    inner = heads * dim_head
    m = bb * n
    layer = pl.program_id(1)

    # The output block's index_map is constant across the depth axis, so it
    # stays resident in VMEM for the whole layer stack.  Initialize it from x
    # on layer 0; HBM write-back happens once, after the last layer.
    @pl.when(layer == 0)
    def _():
        o_ref[...] = x_ref[...]

    def layernorm(v, g_ref, b_ref):                      # f32 statistics (VPU)
        mu = jnp.mean(v, axis=-1, keepdims=True)
        var = jnp.mean(jnp.square(v - mu), axis=-1, keepdims=True)
        return (v - mu) * jax.lax.rsqrt(var + 1e-5) * g_ref[0] + b_ref[0]

    x2 = o_ref[...].reshape(m, d)                        # [m, D] f32 residual stream

    # ------------------- PreNorm + multi-head attention -------------------
    xn = layernorm(x2, g1_ref, bt1_ref).astype(jnp.bfloat16)
    # qkv kept in bf16 (largest attention-side intermediate; every consumer
    # re-casts to bf16 anyway).  f32 accumulation inside the MXU dot.
    qkv = jnp.dot(xn, wqkv_ref[...],
                  preferred_element_type=jnp.float32).astype(jnp.bfloat16)
    qkv3 = qkv.reshape(bb, n, 3 * inner)
    # Q | K | V are three lane-contiguous slabs, sliced once each.  The
    # attention scale is already folded into the Q columns of W_qkv.
    q_all = qkv3[:, :, :inner]
    k_all = qkv3[:, :, inner:2 * inner]
    v_all = qkv3[:, :, 2 * inner:]

    o_heads = []
    for h in range(heads):                               # static unroll over heads
        lo = h * dim_head
        q = q_all[:, :, lo:lo + dim_head]
        k = k_all[:, :, lo:lo + dim_head]
        v = v_all[:, :, lo:lo + dim_head]
        s = jnp.einsum('bnd,bmd->bnm', q, k,
                       preferred_element_type=jnp.float32)        # [bb, N, N] f32
        s_max = jnp.max(s, axis=-1, keepdims=True)                # f32 softmax
        p = jnp.exp(s - s_max)
        p = p * pl.reciprocal(jnp.sum(p, axis=-1, keepdims=True), approx=True)
        o_heads.append(jnp.einsum('bnm,bmd->bnd', p.astype(jnp.bfloat16), v,
                                  preferred_element_type=jnp.float32))
    # TODO(synk): for long sequences, replace the full [N, N] score tile with a
    # flash-style online-softmax loop over key tiles (running m/l/acc stats).

    # Single output projection with K = inner (one full-depth MXU pass instead
    # of `heads` K=dim_head matmuls):  concat_h(o_h) @ W_out.
    o_cat = jnp.concatenate(o_heads, axis=-1).reshape(m, inner).astype(jnp.bfloat16)
    attn = jnp.dot(o_cat, wout_ref[...], preferred_element_type=jnp.float32)
    x2 = x2 + attn + bout_ref[0]                         # residual + out-proj bias

    # ------------------------ PreNorm + FeedForward ------------------------
    xn2 = layernorm(x2, g2_ref, bt2_ref).astype(jnp.bfloat16)
    h1 = jnp.dot(xn2, w1_ref[...], preferred_element_type=jnp.float32) + b1_ref[0]
    if use_approx_gelu:
        h1 = jax.nn.gelu(h1, approximate=True)           # tanh -> EUP slot (opt-in)
    else:
        # exact erf-GELU (PyTorch nn.GELU default), f32
        h1 = 0.5 * h1 * (1.0 + jax.lax.erf(h1 * 0.7071067811865475))
    h2 = jnp.dot(h1.astype(jnp.bfloat16), w2_ref[...],
                 preferred_element_type=jnp.float32) + b2_ref[0]
    x2 = x2 + h2                                         # residual

    o_ref[...] = x2.reshape(bb, n, d)


# ----------------------------------------------------------------------------
# VMEM budgeting (generation-aware)
# ----------------------------------------------------------------------------
def _physical_vmem_bytes():
    """Best-effort physical VMEM per TensorCore; conservative fallback (v7x)."""
    try:
        return int(pltpu.get_tpu_info().vmem_capacity_bytes)
    except Exception:
        return 64 * 2 ** 20


def _vmem_limit_bytes(bb, n, d, inner, mlp, heads, per_layer_weight_bytes):
    m = bb * n
    act_tile = bb * n * d * 4                         # f32 activation tile
    intermediates = (m * 3 * inner * 2                # qkv (bf16)
                     + heads * bb * n * n * 4         # f32 score tiles (unrolled heads)
                     + 2 * m * inner * 4              # per-head outs + concat
                     + m * mlp * 4                    # h1 (f32)
                     + 3 * m * d * 4)                 # xn / attn / h2 temporaries (f32)
    need = (2 * per_layer_weight_bytes                # depth-axis double-buffered weights
            + 2 * act_tile                            # x block (double-buffered)
            + 2 * act_tile                            # output / residual block
            + intermediates)
    need = int(need * 1.5) + (4 << 20)                # Mosaic internal scratch headroom
    phys = _physical_vmem_bytes()
    # v5e/v6e (128 MiB) may go well past 64 MiB; v7x (64 MiB) stays <= ~54 MiB.
    return int(max(32 << 20, min(need, int(phys * 0.85), 100 << 20)))


# ----------------------------------------------------------------------------
# Wrapper: one pallas_call for the whole transformer stack.
# ----------------------------------------------------------------------------
def transformer_forward(x, params, *, heads, dim_head, batch_block=None,
                        use_approx_gelu=False):
    """Fused forward pass.

    batch_block: batch rows processed per grid step.  Default (None) uses the
    whole batch as one tile (max MXU rows; best on single-TC v5e/v6e).  On v7x
    pass B // 2 (or a smaller even split) so the "parallel" batch axis shards
    across the two TensorCores.
    """
    B, N, D = x.shape
    depth = params["wqkv"].shape[0]
    inner = heads * dim_head
    mlp = params["w1"].shape[-1]

    bb = B if batch_block is None else min(batch_block, B)
    assert B % bb == 0, "batch must be divisible by the batch tile"
    nb = B // bb

    def wspec(trailing_shape):
        nz = len(trailing_shape)
        # Leading depth dim squeezed out; block index follows the layer axis.
        return pl.BlockSpec((None,) + tuple(trailing_shape),
                            lambda b, l, _nz=nz: (l,) + (0,) * _nz)

    kernel = functools.partial(_transformer_kernel, heads=heads,
                               dim_head=dim_head, use_approx_gelu=use_approx_gelu)

    per_layer_weight_bytes = 2 * (params["wqkv"].size + params["wout"].size +
                                  params["w1"].size + params["w2"].size) // depth
    vmem_limit = _vmem_limit_bytes(bb, N, D, inner, mlp, heads,
                                   per_layer_weight_bytes)

    # TODO(synk): at realistic model dims on v7x (64 MiB VMEM), split W1/W2
    # along the mlp axis with an extra grid dimension (pl.when-gated
    # accumulator) so double-buffered weight blocks still fit.
    return pl.pallas_call(
        kernel,
        out_shape=jax.ShapeDtypeStruct((B, N, D), jnp.float32),
        grid_spec=pltpu.PrefetchScalarGridSpec(
            num_scalar_prefetch=0,
            grid=(nb, depth),                               # (parallel, arbitrary)
            in_specs=[
                pl.BlockSpec((bb, N, D), lambda b, l: (b, 0, 0)),   # x
                wspec((1, D)),                                      # ln1 gamma
                wspec((1, D)),                                      # ln1 beta
                wspec((D, 3 * inner)),                              # W_qkv (bf16)
                wspec((inner, D)),                                  # W_out (bf16)
                wspec((1, D)),                                      # b_out
                wspec((1, D)),                                      # ln2 gamma
                wspec((1, D)),                                      # ln2 beta
                wspec((D, mlp)),                                    # W1 (bf16)
                wspec((1, mlp)),                                    # b1
                wspec((mlp, D)),                                    # W2 (bf16)
                wspec((1, D)),                                      # b2
            ],
            # Same block index for every depth step -> resident residual stream.
            out_specs=pl.BlockSpec((bb, N, D), lambda b, l: (b, 0, 0)),
        ),
        compiler_params=pltpu.CompilerParams(
            dimension_semantics=("parallel", "arbitrary"),
            vmem_limit_bytes=vmem_limit),
    )(x, params["g1"], params["bt1"], params["wqkv"], params["wout"],
      params["bout"], params["g2"], params["bt2"], params["w1"], params["b1"],
      params["w2"], params["b2"])


# ----------------------------------------------------------------------------
# Deterministic parameter init (weights stacked along depth; matmul weights
# bf16; attention scale pre-folded into the Q columns of W_qkv).
# ----------------------------------------------------------------------------
def init_params(key, depth, dim, heads, dim_head, mlp_dim):
    inner = heads * dim_head
    scale = float(dim_head) ** -0.5
    names = ["g1", "bt1", "wqkv", "wout", "bout", "g2", "bt2", "w1", "b1", "w2", "b2"]
    per = {k: [] for k in names}
    for _ in range(depth):
        key, k1, k2, k3, k4 = jax.random.split(key, 5)
        wqkv = 0.02 * jax.random.normal(k1, (dim, 3 * inner), jnp.float32)
        # Fold the attention scale into the Q columns (one-time, host side):
        # (q*scale) @ k^T == scale * (q @ k^T)  ->  no in-kernel multiply.
        wqkv = wqkv.at[:, :inner].multiply(scale)
        per["g1"].append(jnp.ones((1, dim), jnp.float32))
        per["bt1"].append(jnp.zeros((1, dim), jnp.float32))
        per["wqkv"].append(wqkv.astype(jnp.bfloat16))
        per["wout"].append((0.02 * jax.random.normal(k2, (inner, dim),
                                                     jnp.float32)).astype(jnp.bfloat16))
        per["bout"].append(jnp.zeros((1, dim), jnp.float32))
        per["g2"].append(jnp.ones((1, dim), jnp.float32))
        per["bt2"].append(jnp.zeros((1, dim), jnp.float32))
        per["w1"].append((0.02 * jax.random.normal(k3, (dim, mlp_dim),
                                                   jnp.float32)).astype(jnp.bfloat16))
        per["b1"].append(jnp.zeros((1, mlp_dim), jnp.float32))
        per["w2"].append((0.02 * jax.random.normal(k4, (mlp_dim, dim),
                                                   jnp.float32)).astype(jnp.bfloat16))
        per["b2"].append(jnp.zeros((1, dim), jnp.float32))
    return {k: jnp.stack(v, axis=0) for k, v in per.items()}


# ----------------------------------------------------------------------------
# Pure-JAX (XLA) reference for a correctness sanity check.
# ----------------------------------------------------------------------------
def transformer_reference(x, params, *, heads, dim_head):
    depth = params["wqkv"].shape[0]
    inner = heads * dim_head
    B, N, D = x.shape

    def ln(v, g, b):
        mu = v.mean(-1, keepdims=True)
        var = ((v - mu) ** 2).mean(-1, keepdims=True)
        return (v - mu) * jax.lax.rsqrt(var + 1e-5) * g + b

    out = x
    for l in range(depth):
        p32 = lambda name: params[name][l].astype(jnp.float32)
        xn = ln(out, p32("g1"), p32("bt1"))
        qkv = xn @ p32("wqkv")
        q, k, v = jnp.split(qkv, 3, axis=-1)
        sh = lambda t: t.reshape(B, N, heads, dim_head).transpose(0, 2, 1, 3)
        q, k, v = sh(q), sh(k), sh(v)
        s = jnp.einsum('bhnd,bhmd->bhnm', q, k)          # scale pre-folded into W_qkv
        p = jax.nn.softmax(s, axis=-1)
        o = jnp.einsum('bhnm,bhmd->bhnd', p, v)
        o = o.transpose(0, 2, 1, 3).reshape(B, N, inner)
        out = out + o @ p32("wout") + p32("bout")
        xn2 = ln(out, p32("g2"), p32("bt2"))
        h1 = xn2 @ p32("w1") + p32("b1")
        h1 = 0.5 * h1 * (1.0 + jax.lax.erf(h1 * 0.7071067811865475))
        out = out + h1 @ p32("w2") + p32("b2")
    return out


if __name__ == "__main__":
    # Transformer(dim=32, depth=2, heads=4, dim_head=16, mlp_dim=64, dropout=0.0)
    B, N = 2, 8
    DIM, DEPTH, HEADS, DIM_HEAD, MLP_DIM = 32, 2, 4, 16, 64

    key = jax.random.PRNGKey(0)
    kx, kp = jax.random.split(key)
    x = jax.random.normal(kx, (B, N, DIM), jnp.float32)
    params = init_params(kp, DEPTH, DIM, HEADS, DIM_HEAD, MLP_DIM)

    # Default batch tile = whole batch (max MXU rows); pass batch_block=B//2 on v7x.
    out = transformer_forward(x, params, heads=HEADS, dim_head=DIM_HEAD)
    out = jax.block_until_ready(out)
    assert out.shape == (B, N, DIM) and out.dtype == jnp.float32
    assert bool(jnp.all(jnp.isfinite(out)))

    ref = transformer_reference(x, params, heads=HEADS, dim_head=DIM_HEAD)
    max_err = float(jnp.max(jnp.abs(out - ref)))
    # bf16 matmul operands + approx softmax reciprocal -> small deviations only.
    assert max_err < 5e-2, f"kernel deviates from reference: {max_err}"
    print("KERNEL_OK")
</pallas_src>

<mosaic_0001>
module attributes {stable_mosaic.version = 11 : i64} {
  func.func @_transformer_kernel(%arg0: i32, %arg1: i32, %arg2: memref<2x8x32xf32, #tpu.memory_space<vmem>>, %arg3: memref<1x1x32xf32, #tpu.memory_space<vmem>>, %arg4: memref<1x1x32xf32, #tpu.memory_space<vmem>>, %arg5: memref<1x32x192xbf16, #tpu.memory_space<vmem>>, %arg6: memref<1x64x32xbf16, #tpu.memory_space<vmem>>, %arg7: memref<1x1x32xf32, #tpu.memory_space<vmem>>, %arg8: memref<1x1x32xf32, #tpu.memory_space<vmem>>, %arg9: memref<1x1x32xf32, #tpu.memory_space<vmem>>, %arg10: memref<1x32x64xbf16, #tpu.memory_space<vmem>>, %arg11: memref<1x1x64xf32, #tpu.memory_space<vmem>>, %arg12: memref<1x64x32xbf16, #tpu.memory_space<vmem>>, %arg13: memref<1x1x32xf32, #tpu.memory_space<vmem>>, %arg14: memref<2x8x32xf32, #tpu.memory_space<vmem>>) attributes {dimension_semantics = [#tpu.dimension_semantics<parallel>, #tpu.dimension_semantics<arbitrary>], iteration_bounds = array<i64: 1, 2>, scalar_prefetch = 0 : i64, scratch_operands = 0 : i64, tpu.core_type = #tpu.core_type<tc>, window_params = [{transform_indices = @transform_0, window_bounds = array<i64: 2, 8, 32>}, {transform_indices = @transform_1, window_bounds = array<i64: 1, 1, 32>}, {transform_indices = @transform_2, window_bounds = array<i64: 1, 1, 32>}, {transform_indices = @transform_3, window_bounds = array<i64: 1, 32, 192>}, {transform_indices = @transform_4, window_bounds = array<i64: 1, 64, 32>}, {transform_indices = @transform_5, window_bounds = array<i64: 1, 1, 32>}, {transform_indices = @transform_6, window_bounds = array<i64: 1, 1, 32>}, {transform_indices = @transform_7, window_bounds = array<i64: 1, 1, 32>}, {transform_indices = @transform_8, window_bounds = array<i64: 1, 32, 64>}, {transform_indices = @transform_9, window_bounds = array<i64: 1, 1, 64>}, {transform_indices = @transform_10, window_bounds = array<i64: 1, 64, 32>}, {transform_indices = @transform_11, window_bounds = array<i64: 1, 1, 32>}, {transform_indices = @transform_12, window_bounds = array<i64: 2, 8, 32>}]} {
    %c0_i32 = arith.constant 0 : i32
    %0 = arith.cmpi eq, %arg1, %c0_i32 : i32
    %1 = arith.extui %0 : i1 to i32
    %c0_i32_0 = arith.constant 0 : i32
    %2 = arith.cmpi ne, %1, %c0_i32_0 : i32
    scf.if %2 {
      %c0_71 = arith.constant 0 : index
      %c0_72 = arith.constant 0 : index
      %c0_73 = arith.constant 0 : index
      %175 = vector.load %arg2[%c0_71, %c0_72, %c0_73] : memref<2x8x32xf32, #tpu.memory_space<vmem>>, vector<2x8x32xf32>
      %c0_74 = arith.constant 0 : index
      %c0_75 = arith.constant 0 : index
      %c0_76 = arith.constant 0 : index
      %176 = vector.load %arg14[%c0_74, %c0_75, %c0_76] : memref<2x8x32xf32, #tpu.memory_space<vmem>>, vector<2x8x32xf32>
      tpu.vector_store %arg14[%c0_74, %c0_75, %c0_76], %175 {strides = array<i32>} : memref<2x8x32xf32, #tpu.memory_space<vmem>>, vector<2x8x32xf32>,
    } else {
    }
    %c0 = arith.constant 0 : index
    %c0_1 = arith.constant 0 : index
    %c0_2 = arith.constant 0 : index
    %3 = vector.load %arg14[%c0, %c0_1, %c0_2] : memref<2x8x32xf32, #tpu.memory_space<vmem>>, vector<2x8x32xf32>
    %4 = vector.shape_cast %3 : vector<2x8x32xf32> to vector<16x32xf32>
    %cst = arith.constant dense<0.000000e+00> : vector<16xf32>
    %5 = vector.multi_reduction <add>, %4, %cst [1] : vector<16x32xf32> to vector<16xf32>
    %6 = vector.shape_cast %5 : vector<16xf32> to vector<16x1xf32>
    %cst_3 = arith.constant 3.200000e+01 : f32
    %7 = vector.broadcast %cst_3 : f32 to vector<16x1xf32>
    %8 = arith.divf %6, %7 : vector<16x1xf32>
    %9 = vector.broadcast %8 : vector<16x1xf32> to vector<16x32xf32>
    %10 = arith.subf %4, %9 : vector<16x32xf32>
    %11 = arith.mulf %10, %10 : vector<16x32xf32>
    %cst_4 = arith.constant dense<0.000000e+00> : vector<16xf32>
    %12 = vector.multi_reduction <add>, %11, %cst_4 [1] : vector<16x32xf32> to vector<16xf32>
    %13 = vector.shape_cast %12 : vector<16xf32> to vector<16x1xf32>
    %cst_5 = arith.constant 3.200000e+01 : f32
    %14 = vector.broadcast %cst_5 : f32 to vector<16x1xf32>
    %15 = arith.divf %13, %14 : vector<16x1xf32>
    %16 = vector.broadcast %8 : vector<16x1xf32> to vector<16x32xf32>
    %17 = arith.subf %4, %16 : vector<16x32xf32>
    %cst_6 = arith.constant 9.99999974E-6 : f32
    %18 = vector.broadcast %cst_6 : f32 to vector<16x1xf32>
    %19 = arith.addf %15, %18 : vector<16x1xf32>
    %20 = math.rsqrt %19 : vector<16x1xf32>
    %21 = vector.broadcast %20 : vector<16x1xf32> to vector<16x32xf32>
    %22 = arith.mulf %17, %21 : vector<16x32xf32>
    %c0_7 = arith.constant 0 : index
    %c0_8 = arith.constant 0 : index
    %c0_9 = arith.constant 0 : index
    %23 = vector.load %arg3[%c0_7, %c0_8, %c0_9] : memref<1x1x32xf32, #tpu.memory_space<vmem>>, vector<1x1x32xf32>
    %24 = vector.shape_cast %23 : vector<1x1x32xf32> to vector<32xf32>
    %25 = vector.shape_cast %24 : vector<32xf32> to vector<1x32xf32>
    %26 = vector.broadcast %25 : vector<1x32xf32> to vector<16x32xf32>
    %27 = arith.mulf %22, %26 : vector<16x32xf32>
    %c0_10 = arith.constant 0 : index
    %c0_11 = arith.constant 0 : index
    %c0_12 = arith.constant 0 : index
    %28 = vector.load %arg4[%c0_10, %c0_11, %c0_12] : memref<1x1x32xf32, #tpu.memory_space<vmem>>, vector<1x1x32xf32>
    %29 = vector.shape_cast %28 : vector<1x1x32xf32> to vector<32xf32>
    %30 = vector.shape_cast %29 : vector<32xf32> to vector<1x32xf32>
    %31 = vector.broadcast %30 : vector<1x32xf32> to vector<16x32xf32>
    %32 = arith.addf %27, %31 : vector<16x32xf32>
    %33 = arith.truncf %32 : vector<16x32xf32> to vector<16x32xbf16>
    %c0_13 = arith.constant 0 : index
    %c0_14 = arith.constant 0 : index
    %c0_15 = arith.constant 0 : index
    %34 = vector.load %arg5[%c0_13, %c0_14, %c0_15] : memref<1x32x192xbf16, #tpu.memory_space<vmem>>, vector<1x32x192xbf16>
    %35 = vector.shape_cast %34 : vector<1x32x192xbf16> to vector<32x192xbf16>
    %cst_16 = arith.constant dense<0.000000e+00> : vector<16x192xf32>
    %36 = tpu.matmul %33, %35, %cst_16 {dimension_numbers = #tpu.dot_dimension_numbers<[1], [0], [0], [1], [0, 0, 1, 1], [], []>} : vector<16x32xbf16>, vector<32x192xbf16>, vector<16x192xf32> -> vector<16x192xf32>
    %37 = arith.truncf %36 : vector<16x192xf32> to vector<16x192xbf16>
    %38 = vector.shape_cast %37 : vector<16x192xbf16> to vector<2x8x192xbf16>
    %39 = vector.extract_strided_slice %38 {offsets = [0, 0, 0], sizes = [2, 8, 64], strides = [1, 1, 1]} : vector<2x8x192xbf16> to vector<2x8x64xbf16>
    %40 = vector.extract_strided_slice %38 {offsets = [0, 0, 64], sizes = [2, 8, 64], strides = [1, 1, 1]} : vector<2x8x192xbf16> to vector<2x8x64xbf16>
    %41 = vector.extract_strided_slice %38 {offsets = [0, 0, 128], sizes = [2, 8, 64], strides = [1, 1, 1]} : vector<2x8x192xbf16> to vector<2x8x64xbf16>
    %42 = vector.extract_strided_slice %39 {offsets = [0, 0, 0], sizes = [2, 8, 16], strides = [1, 1, 1]} : vector<2x8x64xbf16> to vector<2x8x16xbf16>
    %43 = vector.extract_strided_slice %40 {offsets = [0, 0, 0], sizes = [2, 8, 16], strides = [1, 1, 1]} : vector<2x8x64xbf16> to vector<2x8x16xbf16>
    %44 = vector.extract_strided_slice %41 {offsets = [0, 0, 0], sizes = [2, 8, 16], strides = [1, 1, 1]} : vector<2x8x64xbf16> to vector<2x8x16xbf16>
    "tpu.trace_start"() <{level = 10 : i32, message = "bnd,bmd->bnm"}> : () -> ()
    %cst_17 = arith.constant dense<0.000000e+00> : vector<2x8x8xf32>
    %45 = tpu.matmul %42, %43, %cst_17 {dimension_numbers = #tpu.dot_dimension_numbers<[2], [2], [1], [1], [0, 0, 0, 1, 1, 1], [0], [0]>} : vector<2x8x16xbf16>, vector<2x8x16xbf16>, vector<2x8x8xf32> -> vector<2x8x8xf32>
    "tpu.trace_stop"() : () -> ()
    %cst_18 = arith.constant dense<0xFF800000> : vector<2x8xf32>
    %46 = vector.multi_reduction <maximumf>, %45, %cst_18 [2] : vector<2x8x8xf32> to vector<2x8xf32>
    %47 = vector.shape_cast %46 : vector<2x8xf32> to vector<2x8x1xf32>
    %48 = vector.broadcast %47 : vector<2x8x1xf32> to vector<2x8x8xf32>
    %49 = arith.subf %45, %48 : vector<2x8x8xf32>
    %50 = math.exp %49 : vector<2x8x8xf32>
    %cst_19 = arith.constant dense<0.000000e+00> : vector<2x8xf32>
    %51 = vector.multi_reduction <add>, %50, %cst_19 [2] : vector<2x8x8xf32> to vector<2x8xf32>
    %52 = vector.shape_cast %51 : vector<2x8xf32> to vector<2x8x1xf32>
    %53 = tpu.reciprocal %52 {approx = true} : vector<2x8x1xf32> -> vector<2x8x1xf32>
    %54 = vector.broadcast %53 : vector<2x8x1xf32> to vector<2x8x8xf32>
    %55 = arith.mulf %50, %54 : vector<2x8x8xf32>
    %56 = arith.truncf %55 : vector<2x8x8xf32> to vector<2x8x8xbf16>
    "tpu.trace_start"() <{level = 10 : i32, message = "bnm,bmd->bnd"}> : () -> ()
    %cst_20 = arith.constant dense<0.000000e+00> : vector<2x8x16xf32>
    %57 = tpu.matmul %56, %44, %cst_20 {dimension_numbers = #tpu.dot_dimension_numbers<[2], [1], [1], [2], [0, 0, 0, 1, 1, 2], [0], [0]>} : vector<2x8x8xbf16>, vector<2x8x16xbf16>, vector<2x8x16xf32> -> vector<2x8x16xf32>
    "tpu.trace_stop"() : () -> ()
    %58 = vector.extract_strided_slice %39 {offsets = [0, 0, 16], sizes = [2, 8, 16], strides = [1, 1, 1]} : vector<2x8x64xbf16> to vector<2x8x16xbf16>
    %59 = vector.extract_strided_slice %40 {offsets = [0, 0, 16], sizes = [2, 8, 16], strides = [1, 1, 1]} : vector<2x8x64xbf16> to vector<2x8x16xbf16>
    %60 = vector.extract_strided_slice %41 {offsets = [0, 0, 16], sizes = [2, 8, 16], strides = [1, 1, 1]} : vector<2x8x64xbf16> to vector<2x8x16xbf16>
    "tpu.trace_start"() <{level = 10 : i32, message = "bnd,bmd->bnm"}> : () -> ()
    %cst_21 = arith.constant dense<0.000000e+00> : vector<2x8x8xf32>
    %61 = tpu.matmul %58, %59, %cst_21 {dimension_numbers = #tpu.dot_dimension_numbers<[2], [2], [1], [1], [0, 0, 0, 1, 1, 1], [0], [0]>} : vector<2x8x16xbf16>, vector<2x8x16xbf16>, vector<2x8x8xf32> -> vector<2x8x8xf32>
    "tpu.trace_stop"() : () -> ()
    %cst_22 = arith.constant dense<0xFF800000> : vector<2x8xf32>
    %62 = vector.multi_reduction <maximumf>, %61, %cst_22 [2] : vector<2x8x8xf32> to vector<2x8xf32>
    %63 = vector.shape_cast %62 : vector<2x8xf32> to vector<2x8x1xf32>
    %64 = vector.broadcast %63 : vector<2x8x1xf32> to vector<2x8x8xf32>
    %65 = arith.subf %61, %64 : vector<2x8x8xf32>
    %66 = math.exp %65 : vector<2x8x8xf32>
    %cst_23 = arith.constant dense<0.000000e+00> : vector<2x8xf32>
    %67 = vector.multi_reduction <add>, %66, %cst_23 [2] : vector<2x8x8xf32> to vector<2x8xf32>
    %68 = vector.shape_cast %67 : vector<2x8xf32> to vector<2x8x1xf32>
    %69 = tpu.reciprocal %68 {approx = true} : vector<2x8x1xf32> -> vector<2x8x1xf32>
    %70 = vector.broadcast %69 : vector<2x8x1xf32> to vector<2x8x8xf32>
    %71 = arith.mulf %66, %70 : vector<2x8x8xf32>
    %72 = arith.truncf %71 : vector<2x8x8xf32> to vector<2x8x8xbf16>
    "tpu.trace_start"() <{level = 10 : i32, message = "bnm,bmd->bnd"}> : () -> ()
    %cst_24 = arith.constant dense<0.000000e+00> : vector<2x8x16xf32>
    %73 = tpu.matmul %72, %60, %cst_24 {dimension_numbers = #tpu.dot_dimension_numbers<[2], [1], [1], [2], [0, 0, 0, 1, 1, 2], [0], [0]>} : vector<2x8x8xbf16>, vector<2x8x16xbf16>, vector<2x8x16xf32> -> vector<2x8x16xf32>
    "tpu.trace_stop"() : () -> ()
    %74 = vector.extract_strided_slice %39 {offsets = [0, 0, 32], sizes = [2, 8, 16], strides = [1, 1, 1]} : vector<2x8x64xbf16> to vector<2x8x16xbf16>
    %75 = vector.extract_strided_slice %40 {offsets = [0, 0, 32], sizes = [2, 8, 16], strides = [1, 1, 1]} : vector<2x8x64xbf16> to vector<2x8x16xbf16>
    %76 = vector.extract_strided_slice %41 {offsets = [0, 0, 32], sizes = [2, 8, 16], strides = [1, 1, 1]} : vector<2x8x64xbf16> to vector<2x8x16xbf16>
    "tpu.trace_start"() <{level = 10 : i32, message = "bnd,bmd->bnm"}> : () -> ()
    %cst_25 = arith.constant dense<0.000000e+00> : vector<2x8x8xf32>
    %77 = tpu.matmul %74, %75, %cst_25 {dimension_numbers = #tpu.dot_dimension_numbers<[2], [2], [1], [1], [0, 0, 0, 1, 1, 1], [0], [0]>} : vector<2x8x16xbf16>, vector<2x8x16xbf16>, vector<2x8x8xf32> -> vector<2x8x8xf32>
    "tpu.trace_stop"() : () -> ()
    %cst_26 = arith.constant dense<0xFF800000> : vector<2x8xf32>
    %78 = vector.multi_reduction <maximumf>, %77, %cst_26 [2] : vector<2x8x8xf32> to vector<2x8xf32>
    %79 = vector.shape_cast %78 : vector<2x8xf32> to vector<2x8x1xf32>
    %80 = vector.broadcast %79 : vector<2x8x1xf32> to vector<2x8x8xf32>
    %81 = arith.subf %77, %80 : vector<2x8x8xf32>
    %82 = math.exp %81 : vector<2x8x8xf32>
    %cst_27 = arith.constant dense<0.000000e+00> : vector<2x8xf32>
    %83 = vector.multi_reduction <add>, %82, %cst_27 [2] : vector<2x8x8xf32> to vector<2x8xf32>
    %84 = vector.shape_cast %83 : vector<2x8xf32> to vector<2x8x1xf32>
    %85 = tpu.reciprocal %84 {approx = true} : vector<2x8x1xf32> -> vector<2x8x1xf32>
    %86 = vector.broadcast %85 : vector<2x8x1xf32> to vector<2x8x8xf32>
    %87 = arith.mulf %82, %86 : vector<2x8x8xf32>
    %88 = arith.truncf %87 : vector<2x8x8xf32> to vector<2x8x8xbf16>
    "tpu.trace_start"() <{level = 10 : i32, message = "bnm,bmd->bnd"}> : () -> ()
    %cst_28 = arith.constant dense<0.000000e+00> : vector<2x8x16xf32>
    %89 = tpu.matmul %88, %76, %cst_28 {dimension_numbers = #tpu.dot_dimension_numbers<[2], [1], [1], [2], [0, 0, 0, 1, 1, 2], [0], [0]>} : vector<2x8x8xbf16>, vector<2x8x16xbf16>, vector<2x8x16xf32> -> vector<2x8x16xf32>
    "tpu.trace_stop"() : () -> ()
    %90 = vector.extract_strided_slice %39 {offsets = [0, 0, 48], sizes = [2, 8, 16], strides = [1, 1, 1]} : vector<2x8x64xbf16> to vector<2x8x16xbf16>
    %91 = vector.extract_strided_slice %40 {offsets = [0, 0, 48], sizes = [2, 8, 16], strides = [1, 1, 1]} : vector<2x8x64xbf16> to vector<2x8x16xbf16>
    %92 = vector.extract_strided_slice %41 {offsets = [0, 0, 48], sizes = [2, 8, 16], strides = [1, 1, 1]} : vector<2x8x64xbf16> to vector<2x8x16xbf16>
    "tpu.trace_start"() <{level = 10 : i32, message = "bnd,bmd->bnm"}> : () -> ()
    %cst_29 = arith.constant dense<0.000000e+00> : vector<2x8x8xf32>
    %93 = tpu.matmul %90, %91, %cst_29 {dimension_numbers = #tpu.dot_dimension_numbers<[2], [2], [1], [1], [0, 0, 0, 1, 1, 1], [0], [0]>} : vector<2x8x16xbf16>, vector<2x8x16xbf16>, vector<2x8x8xf32> -> vector<2x8x8xf32>
    "tpu.trace_stop"() : () -> ()
    %cst_30 = arith.constant dense<0xFF800000> : vector<2x8xf32>
    %94 = vector.multi_reduction <maximumf>, %93, %cst_30 [2] : vector<2x8x8xf32> to vector<2x8xf32>
    %95 = vector.shape_cast %94 : vector<2x8xf32> to vector<2x8x1xf32>
    %96 = vector.broadcast %95 : vector<2x8x1xf32> to vector<2x8x8xf32>
    %97 = arith.subf %93, %96 : vector<2x8x8xf32>
    %98 = math.exp %97 : vector<2x8x8xf32>
    %cst_31 = arith.constant dense<0.000000e+00> : vector<2x8xf32>
    %99 = vector.multi_reduction <add>, %98, %cst_31 [2] : vector<2x8x8xf32> to vector<2x8xf32>
    %100 = vector.shape_cast %99 : vector<2x8xf32> to vector<2x8x1xf32>
    %101 = tpu.reciprocal %100 {approx = true} : vector<2x8x1xf32> -> vector<2x8x1xf32>
    %102 = vector.broadcast %101 : vector<2x8x1xf32> to vector<2x8x8xf32>
    %103 = arith.mulf %98, %102 : vector<2x8x8xf32>
    %104 = arith.truncf %103 : vector<2x8x8xf32> to vector<2x8x8xbf16>
    "tpu.trace_start"() <{level = 10 : i32, message = "bnm,bmd->bnd"}> : () -> ()
    %cst_32 = arith.constant dense<0.000000e+00> : vector<2x8x16xf32>
    %105 = tpu.matmul %104, %92, %cst_32 {dimension_numbers = #tpu.dot_dimension_numbers<[2], [1], [1], [2], [0, 0, 0, 1, 1, 2], [0], [0]>} : vector<2x8x8xbf16>, vector<2x8x16xbf16>, vector<2x8x16xf32> -> vector<2x8x16xf32>
    "tpu.trace_stop"() : () -> ()
    %106 = tpu.concatenate %57, %73, %89, %105 in 2 : vector<2x8x16xf32>, vector<2x8x16xf32>, vector<2x8x16xf32>, vector<2x8x16xf32> -> vector<2x8x64xf32>
    %107 = vector.shape_cast %106 : vector<2x8x64xf32> to vector<16x64xf32>
    %108 = arith.truncf %107 : vector<16x64xf32> to vector<16x64xbf16>
    %c0_33 = arith.constant 0 : index
    %c0_34 = arith.constant 0 : index
    %c0_35 = arith.constant 0 : index
    %109 = vector.load %arg6[%c0_33, %c0_34, %c0_35] : memref<1x64x32xbf16, #tpu.memory_space<vmem>>, vector<1x64x32xbf16>
    %110 = vector.shape_cast %109 : vector<1x64x32xbf16> to vector<64x32xbf16>
    %cst_36 = arith.constant dense<0.000000e+00> : vector<16x32xf32>
    %111 = tpu.matmul %108, %110, %cst_36 {dimension_numbers = #tpu.dot_dimension_numbers<[1], [0], [0], [1], [0, 0, 1, 1], [], []>} : vector<16x64xbf16>, vector<64x32xbf16>, vector<16x32xf32> -> vector<16x32xf32>
    %112 = arith.addf %4, %111 : vector<16x32xf32>
    %c0_37 = arith.constant 0 : index
    %c0_38 = arith.constant 0 : index
    %c0_39 = arith.constant 0 : index
    %113 = vector.load %arg7[%c0_37, %c0_38, %c0_39] : memref<1x1x32xf32, #tpu.memory_space<vmem>>, vector<1x1x32xf32>
    %114 = vector.shape_cast %113 : vector<1x1x32xf32> to vector<32xf32>
    %115 = vector.shape_cast %114 : vector<32xf32> to vector<1x32xf32>
    %116 = vector.broadcast %115 : vector<1x32xf32> to vector<16x32xf32>
    %117 = arith.addf %112, %116 : vector<16x32xf32>
    %cst_40 = arith.constant dense<0.000000e+00> : vector<16xf32>
    %118 = vector.multi_reduction <add>, %117, %cst_40 [1] : vector<16x32xf32> to vector<16xf32>
    %119 = vector.shape_cast %118 : vector<16xf32> to vector<16x1xf32>
    %cst_41 = arith.constant 3.200000e+01 : f32
    %120 = vector.broadcast %cst_41 : f32 to vector<16x1xf32>
    %121 = arith.divf %119, %120 : vector<16x1xf32>
    %122 = vector.broadcast %121 : vector<16x1xf32> to vector<16x32xf32>
    %123 = arith.subf %117, %122 : vector<16x32xf32>
    %124 = arith.mulf %123, %123 : vector<16x32xf32>
    %cst_42 = arith.constant dense<0.000000e+00> : vector<16xf32>
    %125 = vector.multi_reduction <add>, %124, %cst_42 [1] : vector<16x32xf32> to vector<16xf32>
    %126 = vector.shape_cast %125 : vector<16xf32> to vector<16x1xf32>
    %cst_43 = arith.constant 3.200000e+01 : f32
    %127 = vector.broadcast %cst_43 : f32 to vector<16x1xf32>
    %128 = arith.divf %126, %127 : vector<16x1xf32>
    %129 = vector.broadcast %121 : vector<16x1xf32> to vector<16x32xf32>
    %130 = arith.subf %117, %129 : vector<16x32xf32>
    %cst_44 = arith.constant 9.99999974E-6 : f32
    %131 = vector.broadcast %cst_44 : f32 to vector<16x1xf32>
    %132 = arith.addf %128, %131 : vector<16x1xf32>
    %133 = math.rsqrt %132 : vector<16x1xf32>
    %134 = vector.broadcast %133 : vector<16x1xf32> to vector<16x32xf32>
    %135 = arith.mulf %130, %134 : vector<16x32xf32>
    %c0_45 = arith.constant 0 : index
    %c0_46 = arith.constant 0 : index
    %c0_47 = arith.constant 0 : index
    %136 = vector.load %arg8[%c0_45, %c0_46, %c0_47] : memref<1x1x32xf32, #tpu.memory_space<vmem>>, vector<1x1x32xf32>
    %137 = vector.shape_cast %136 : vector<1x1x32xf32> to vector<32xf32>
    %138 = vector.shape_cast %137 : vector<32xf32> to vector<1x32xf32>
    %139 = vector.broadcast %138 : vector<1x32xf32> to vector<16x32xf32>
    %140 = arith.mulf %135, %139 : vector<16x32xf32>
    %c0_48 = arith.constant 0 : index
    %c0_49 = arith.constant 0 : index
    %c0_50 = arith.constant 0 : index
    %141 = vector.load %arg9[%c0_48, %c0_49, %c0_50] : memref<1x1x32xf32, #tpu.memory_space<vmem>>, vector<1x1x32xf32>
    %142 = vector.shape_cast %141 : vector<1x1x32xf32> to vector<32xf32>
    %143 = vector.shape_cast %142 : vector<32xf32> to vector<1x32xf32>
    %144 = vector.broadcast %143 : vector<1x32xf32> to vector<16x32xf32>
    %145 = arith.addf %140, %144 : vector<16x32xf32>
    %146 = arith.truncf %145 : vector<16x32xf32> to vector<16x32xbf16>
    %c0_51 = arith.constant 0 : index
    %c0_52 = arith.constant 0 : index
    %c0_53 = arith.constant 0 : index
    %147 = vector.load %arg10[%c0_51, %c0_52, %c0_53] : memref<1x32x64xbf16, #tpu.memory_space<vmem>>, vector<1x32x64xbf16>
    %148 = vector.shape_cast %147 : vector<1x32x64xbf16> to vector<32x64xbf16>
    %cst_54 = arith.constant dense<0.000000e+00> : vector<16x64xf32>
    %149 = tpu.matmul %146, %148, %cst_54 {dimension_numbers = #tpu.dot_dimension_numbers<[1], [0], [0], [1], [0, 0, 1, 1], [], []>} : vector<16x32xbf16>, vector<32x64xbf16>, vector<16x64xf32> -> vector<16x64xf32>
    %c0_55 = arith.constant 0 : index
    %c0_56 = arith.constant 0 : index
    %c0_57 = arith.constant 0 : index
    %150 = vector.load %arg11[%c0_55, %c0_56, %c0_57] : memref<1x1x64xf32, #tpu.memory_space<vmem>>, vector<1x1x64xf32>
    %151 = vector.shape_cast %150 : vector<1x1x64xf32> to vector<64xf32>
    %152 = vector.shape_cast %151 : vector<64xf32> to vector<1x64xf32>
    %153 = vector.broadcast %152 : vector<1x64xf32> to vector<16x64xf32>
    %154 = arith.addf %149, %153 : vector<16x64xf32>
    %cst_58 = arith.constant 5.000000e-01 : f32
    %155 = vector.broadcast %cst_58 : f32 to vector<16x64xf32>
    %156 = arith.mulf %155, %154 : vector<16x64xf32>
    %cst_59 = arith.constant 0.707106769 : f32
    %157 = vector.broadcast %cst_59 : f32 to vector<16x64xf32>
    %158 = arith.mulf %154, %157 : vector<16x64xf32>
    %159 = math.erf %158 : vector<16x64xf32>
    %cst_60 = arith.constant 1.000000e+00 : f32
    %160 = vector.broadcast %cst_60 : f32 to vector<16x64xf32>
    %161 = arith.addf %160, %159 : vector<16x64xf32>
    %162 = arith.mulf %156, %161 : vector<16x64xf32>
    %163 = arith.truncf %162 : vector<16x64xf32> to vector<16x64xbf16>
    %c0_61 = arith.constant 0 : index
    %c0_62 = arith.constant 0 : index
    %c0_63 = arith.constant 0 : index
    %164 = vector.load %arg12[%c0_61, %c0_62, %c0_63] : memref<1x64x32xbf16, #tpu.memory_space<vmem>>, vector<1x64x32xbf16>
    %165 = vector.shape_cast %164 : vector<1x64x32xbf16> to vector<64x32xbf16>
    %cst_64 = arith.constant dense<0.000000e+00> : vector<16x32xf32>
    %166 = tpu.matmul %163, %165, %cst_64 {dimension_numbers = #tpu.dot_dimension_numbers<[1], [0], [0], [1], [0, 0, 1, 1], [], []>} : vector<16x64xbf16>, vector<64x32xbf16>, vector<16x32xf32> -> vector<16x32xf32>
    %c0_65 = arith.constant 0 : index
    %c0_66 = arith.constant 0 : index
    %c0_67 = arith.constant 0 : index
    %167 = vector.load %arg13[%c0_65, %c0_66, %c0_67] : memref<1x1x32xf32, #tpu.memory_space<vmem>>, vector<1x1x32xf32>
    %168 = vector.shape_cast %167 : vector<1x1x32xf32> to vector<32xf32>
    %169 = vector.shape_cast %168 : vector<32xf32> to vector<1x32xf32>
    %170 = vector.broadcast %169 : vector<1x32xf32> to vector<16x32xf32>
    %171 = arith.addf %166, %170 : vector<16x32xf32>
    %172 = arith.addf %117, %171 : vector<16x32xf32>
    %173 = vector.shape_cast %172 : vector<16x32xf32> to vector<2x8x32xf32>
    %c0_68 = arith.constant 0 : index
    %c0_69 = arith.constant 0 : index
    %c0_70 = arith.constant 0 : index
    %174 = vector.load %arg14[%c0_68, %c0_69, %c0_70] : memref<2x8x32xf32, #tpu.memory_space<vmem>>, vector<2x8x32xf32>
    tpu.vector_store %arg14[%c0_68, %c0_69, %c0_70], %173 {strides = array<i32>} : memref<2x8x32xf32, #tpu.memory_space<vmem>>, vector<2x8x32xf32>,
    return
  }
  func.func @transform_0(%arg0: i32, %arg1: i32) -> (i32, i32, i32) {
    %c0_i32 = arith.constant 0 : i32
    %c0_i32_0 = arith.constant 0 : i32
    %c0_i32_1 = arith.constant 0 : i32
    return %arg0, %c0_i32, %c0_i32_0 : i32, i32, i32
  }
  func.func @transform_1(%arg0: i32, %arg1: i32) -> (i32, i32, i32) {
    %c0_i32 = arith.constant 0 : i32
    %c0_i32_0 = arith.constant 0 : i32
    %c0_i32_1 = arith.constant 0 : i32
    return %arg1, %c0_i32, %c0_i32_0 : i32, i32, i32
  }
  func.func @transform_2(%arg0: i32, %arg1: i32) -> (i32, i32, i32) {
    %c0_i32 = arith.constant 0 : i32
    %c0_i32_0 = arith.constant 0 : i32
    %c0_i32_1 = arith.constant 0 : i32
    return %arg1, %c0_i32, %c0_i32_0 : i32, i32, i32
  }
  func.func @transform_3(%arg0: i32, %arg1: i32) -> (i32, i32, i32) {
    %c0_i32 = arith.constant 0 : i32
    %c0_i32_0 = arith.constant 0 : i32
    %c0_i32_1 = arith.constant 0 : i32
    return %arg1, %c0_i32, %c0_i32_0 : i32, i32, i32
  }
  func.func @transform_4(%arg0: i32, %arg1: i32) -> (i32, i32, i32) {
    %c0_i32 = arith.constant 0 : i32
    %c0_i32_0 = arith.constant 0 : i32
    %c0_i32_1 = arith.constant 0 : i32
    return %arg1, %c0_i32, %c0_i32_0 : i32, i32, i32
  }
  func.func @transform_5(%arg0: i32, %arg1: i32) -> (i32, i32, i32) {
    %c0_i32 = arith.constant 0 : i32
    %c0_i32_0 = arith.constant 0 : i32
    %c0_i32_1 = arith.constant 0 : i32
    return %arg1, %c0_i32, %c0_i32_0 : i32, i32, i32
  }
  func.func @transform_6(%arg0: i32, %arg1: i32) -> (i32, i32, i32) {
    %c0_i32 = arith.constant 0 : i32
    %c0_i32_0 = arith.constant 0 : i32
    %c0_i32_1 = arith.constant 0 : i32
    return %arg1, %c0_i32, %c0_i32_0 : i32, i32, i32
  }
  func.func @transform_7(%arg0: i32, %arg1: i32) -> (i32, i32, i32) {
    %c0_i32 = arith.constant 0 : i32
    %c0_i32_0 = arith.constant 0 : i32
    %c0_i32_1 = arith.constant 0 : i32
    return %arg1, %c0_i32, %c0_i32_0 : i32, i32, i32
  }
  func.func @transform_8(%arg0: i32, %arg1: i32) -> (i32, i32, i32) {
    %c0_i32 = arith.constant 0 : i32
    %c0_i32_0 = arith.constant 0 : i32
    %c0_i32_1 = arith.constant 0 : i32
    return %arg1, %c0_i32, %c0_i32_0 : i32, i32, i32
  }
  func.func @transform_9(%arg0: i32, %arg1: i32) -> (i32, i32, i32) {
    %c0_i32 = arith.constant 0 : i32
    %c0_i32_0 = arith.constant 0 : i32
    %c0_i32_1 = arith.constant 0 : i32
    return %arg1, %c0_i32, %c0_i32_0 : i32, i32, i32
  }
  func.func @transform_10(%arg0: i32, %arg1: i32) -> (i32, i32, i32) {
    %c0_i32 = arith.constant 0 : i32
    %c0_i32_0 = arith.constant 0 : i32
    %c0_i32_1 = arith.constant 0 : i32
    return %arg1, %c0_i32, %c0_i32_0 : i32, i32, i32
  }
  func.func @transform_11(%arg0: i32, %arg1: i32) -> (i32, i32, i32) {
    %c0_i32 = arith.constant 0 : i32
    %c0_i32_0 = arith.constant 0 : i32
    %c0_i32_1 = arith.constant 0 : i32
    return %arg1, %c0_i32, %c0_i32_0 : i32, i32, i32
  }
  func.func @transform_12(%arg0: i32, %arg1: i32) -> (i32, i32, i32) {
    %c0_i32 = arith.constant 0 : i32
    %c0_i32_0 = arith.constant 0 : i32
    %c0_i32_1 = arith.constant 0 : i32
    return %arg0, %c0_i32, %c0_i32_0 : i32, i32, i32
  }
}

</mosaic_0001>

<llo_original>
// kernel: tpu_custom_call.1
$region0: #{tpu_custom_call.1}
  #allocation0 [shape = 'u32[]', space=smem, size = 0x4, offset = 0x4, fixed_abs, tag = 'smem constant byte address 0x4 - core index']
  #allocation1 [shape = 'u32[144,128]{1,0:T(1,128)}', space=vmem, size = 0x12000, scoped, tag = 'internal scratch']
  %s0 = inlined_call_operand.vmem [shape: f32[2,8,32], index: 0, kind: input, shape index: {}]
  %s1 = inlined_call_operand.vmem [shape: f32[2,1,32], index: 1, kind: input, shape index: {}]
  %s2 = inlined_call_operand.vmem [shape: f32[2,1,32], index: 2, kind: input, shape index: {}]
  %s3 = inlined_call_operand.vmem [shape: bf16[2,32,192], index: 3, kind: input, shape index: {}]
  %s4 = inlined_call_operand.vmem [shape: bf16[2,64,32], index: 4, kind: input, shape index: {}]
  %s5 = inlined_call_operand.vmem [shape: f32[2,1,32], index: 5, kind: input, shape index: {}]
  %s6 = inlined_call_operand.vmem [shape: f32[2,1,32], index: 6, kind: input, shape index: {}]
  %s7 = inlined_call_operand.vmem [shape: f32[2,1,32], index: 7, kind: input, shape index: {}]
  %s8 = inlined_call_operand.vmem [shape: bf16[2,32,64], index: 8, kind: input, shape index: {}]
  %s9 = inlined_call_operand.vmem [shape: f32[2,1,64], index: 9, kind: input, shape index: {}]
  %s10 = inlined_call_operand.vmem [shape: bf16[2,64,32], index: 10, kind: input, shape index: {}]
  %s11 = inlined_call_operand.vmem [shape: f32[2,1,32], index: 11, kind: input, shape index: {}]
  %s12 = inlined_call_operand.hbm [shape: f32[2,8,32], index: 12, kind: output, shape index: {}]
  %s13 = sld [smem:[#allocation0]]
  $region85: #{tpu_custom_call.1} parent=0
    _
  %s15 = ssub.s32 1, %s13
  %s16 = scalar_select 0, %s15, %s13
  $region1: #{tpu_custom_call.1} parent=0
    #allocation2 [shape = 'u8[8192]{0}', space=vmem, size = 0x2000, scoped, tag = 'output window, operand 0, single buffered']
    #allocation3 [shape = 's32[2]{0}', space=sflag, size = 0x8, scoped, tag = 'scoped memory for tpu_custom_call.1']
    %17 = vsyncpa [#allocation3], 0
    loop: start=0, step=1, limit=4
    $region2: #{tpu_custom_call.1} parent=1 // loop_pre_header
      _
    $region3: #{tpu_custom_call.1} parent=1 // loop_header
      %s19 = sphi 0, %s23
      %p20 = scmp.ge.s32.totalorder %s19, 4
      %s26 = sphi 0, %s38
      %s27 = sphi 0, %s34
      %s28 = sphi 0, %s26
      %s29 = sphi 0, %s27
      %s30 = sphi 0, %s28
      %s31 = sphi 0, %s29
      %s41 = sphi 0, %s43
      %s44 = sphi 0, %s41
      %s45 = sphi 0, %s44
      %s61 = sphi 0, %s45
      %s67 = sphi 0, %s69
      %s70 = sphi 0, %s67
      %s71 = sphi 0, %s70
      %s87 = sphi 0, %s71
      %s93 = sphi 0, %s95
      %s96 = sphi 0, %s93
      %s97 = sphi 0, %s96
      %s113 = sphi 0, %s97
      %s119 = sphi 0, %s121
      %s122 = sphi 0, %s119
      %s123 = sphi 0, %s122
      %s139 = sphi 0, %s123
      %s145 = sphi 0, %s147
      %s148 = sphi 0, %s145
      %s149 = sphi 0, %s148
      %s165 = sphi 0, %s149
      %s171 = sphi 0, %s173
      %s174 = sphi 0, %s171
      %s175 = sphi 0, %s174
      %s191 = sphi 0, %s175
      %s197 = sphi 0, %s199
      %s200 = sphi 0, %s197
      %s201 = sphi 0, %s200
      %s217 = sphi 0, %s201
      %s223 = sphi 0, %s225
      %s226 = sphi 0, %s223
      %s227 = sphi 0, %s226
      %s243 = sphi 0, %s227
      %s249 = sphi 0, %s251
      %s252 = sphi 0, %s249
      %s253 = sphi 0, %s252
      %s269 = sphi 0, %s253
      %s275 = sphi 0, %s277
      %s278 = sphi 0, %s275
      %s279 = sphi 0, %s278
      %s295 = sphi 0, %s279
      %s301 = sphi 0, %s303
      %s304 = sphi 0, %s301
      %s305 = sphi 0, %s304
      %s321 = sphi 0, %s305
      %s327 = sphi 0, %s329
      %s330 = sphi 0, %s327
      %s331 = sphi 0, %s330
      %s347 = sphi 0, %s331
      %s353 = sphi 0, %s355
      %s356 = sphi 0, %s353
      %s357 = sphi 0, %s356
      %s373 = sphi 0, %s357
    $region4: #{tpu_custom_call.1} parent=1 // loop_header_branch
      %22 = sbr.rel (%p20) target = $region8
    $region5: #{tpu_custom_call.1} parent=1 // loop_body
      %s24 = ssub.s32 %s19, 1
      %s25 = ssub.s32 %s19, 2
      %s32 = sadd.s32 1, %s27
      %p33 = scmp.ge.s32.totalorder %s32, 2
      %s34 = scalar_select %p33, 0, %s32
      %s35 = sadd.s32 1, %s26
      %s36 = scalar_select %p33, %s35, %s26
      %p37 = scmp.ge.s32.totalorder %s36, 1
      %s38 = scalar_select %p37, 0, %s36
      %s39 = ssub.s32 %s26, %s38
      %p40 = scmp.eq.s32.totalorder %s39, 0
      %s42 = sadd.s32 %s41, 1
      %s43 = scalar_select %p40, %s41, %s42
      %p46 = pneg %p40
      %p47 = scmp.eq.s32.totalorder %s19, 1
      %p48 = por %p46, %p47
      %p49 = scmp.ne.s32.totalorder %s41, %s44
      %p50 = scmp.eq.s32.totalorder %s19, 0
      %p51 = por %p49, %p50
      %p52 = scmp.ne.s32.totalorder %s41, %s44
      %p53 = scmp.eq.s32.totalorder %s24, 1
      %p54 = por %p52, %p53
      %p55 = scmp.ne.s32.totalorder %s44, %s45
      %p56 = scmp.eq.s32.totalorder %s24, 0
      %p57 = por %p55, %p56
      %p58 = scmp.ne.s32.totalorder %s44, %s45
      %p59 = scmp.eq.s32.totalorder %s25, 1
      %p60 = por %p58, %p59
      %p62 = scmp.ne.s32.totalorder %s45, %s61
      %p63 = scmp.eq.s32.totalorder %s25, 0
      %p64 = por %p62, %p63
      %s65 = ssub.s32 %s27, %s34
      %p66 = scmp.eq.s32.totalorder %s65, 0
      %s68 = sadd.s32 %s67, 1
      %s69 = scalar_select %p66, %s67, %s68
      %p72 = pneg %p66
      %p73 = scmp.eq.s32.totalorder %s19, 1
      %p74 = por %p72, %p73
      %p75 = scmp.ne.s32.totalorder %s67, %s70
      %p76 = scmp.eq.s32.totalorder %s19, 0
      %p77 = por %p75, %p76
      %p78 = scmp.ne.s32.totalorder %s67, %s70
      %p79 = scmp.eq.s32.totalorder %s24, 1
      %p80 = por %p78, %p79
      %p81 = scmp.ne.s32.totalorder %s70, %s71
      %p82 = scmp.eq.s32.totalorder %s24, 0
      %p83 = por %p81, %p82
      %p84 = scmp.ne.s32.totalorder %s70, %s71
      %p85 = scmp.eq.s32.totalorder %s25, 1
      %p86 = por %p84, %p85
      %p88 = scmp.ne.s32.totalorder %s71, %s87
      %p89 = scmp.eq.s32.totalorder %s25, 0
      %p90 = por %p88, %p89
      %s91 = ssub.s32 %s27, %s34
      %p92 = scmp.eq.s32.totalorder %s91, 0
      %s94 = sadd.s32 %s93, 1
      %s95 = scalar_select %p92, %s93, %s94
      %p98 = pneg %p92
      %p99 = scmp.eq.s32.totalorder %s19, 1
      %p100 = por %p98, %p99
      %p101 = scmp.ne.s32.totalorder %s93, %s96
      %p102 = scmp.eq.s32.totalorder %s19, 0
      %p103 = por %p101, %p102
      %p104 = scmp.ne.s32.totalorder %s93, %s96
      %p105 = scmp.eq.s32.totalorder %s24, 1
      %p106 = por %p104, %p105
      %p107 = scmp.ne.s32.totalorder %s96, %s97
      %p108 = scmp.eq.s32.totalorder %s24, 0
      %p109 = por %p107, %p108
      %p110 = scmp.ne.s32.totalorder %s96, %s97
      %p111 = scmp.eq.s32.totalorder %s25, 1
      %p112 = por %p110, %p111
      %p114 = scmp.ne.s32.totalorder %s97, %s113
      %p115 = scmp.eq.s32.totalorder %s25, 0
      %p116 = por %p114, %p115
      %s117 = ssub.s32 %s27, %s34
      %p118 = scmp.eq.s32.totalorder %s117, 0
      %s120 = sadd.s32 %s119, 1
      %s121 = scalar_select %p118, %s119, %s120
      %p124 = pneg %p118
      %p125 = scmp.eq.s32.totalorder %s19, 1
      %p126 = por %p124, %p125
      %p127 = scmp.ne.s32.totalorder %s119, %s122
      %p128 = scmp.eq.s32.totalorder %s19, 0
      %p129 = por %p127, %p128
      %p130 = scmp.ne.s32.totalorder %s119, %s122
      %p131 = scmp.eq.s32.totalorder %s24, 1
      %p132 = por %p130, %p131
      %p133 = scmp.ne.s32.totalorder %s122, %s123
      %p134 = scmp.eq.s32.totalorder %s24, 0
      %p135 = por %p133, %p134
      %p136 = scmp.ne.s32.totalorder %s122, %s123
      %p137 = scmp.eq.s32.totalorder %s25, 1
      %p138 = por %p136, %p137
      %p140 = scmp.ne.s32.totalorder %s123, %s139
      %p141 = scmp.eq.s32.totalorder %s25, 0
      %p142 = por %p140, %p141
      %s143 = ssub.s32 %s27, %s34
      %p144 = scmp.eq.s32.totalorder %s143, 0
      %s146 = sadd.s32 %s145, 1
      %s147 = scalar_select %p144, %s145, %s146
      %p150 = pneg %p144
      %p151 = scmp.eq.s32.totalorder %s19, 1
      %p152 = por %p150, %p151
      %p153 = scmp.ne.s32.totalorder %s145, %s148
      %p154 = scmp.eq.s32.totalorder %s19, 0
      %p155 = por %p153, %p154
      %p156 = scmp.ne.s32.totalorder %s145, %s148
      %p157 = scmp.eq.s32.totalorder %s24, 1
      %p158 = por %p156, %p157
      %p159 = scmp.ne.s32.totalorder %s148, %s149
      %p160 = scmp.eq.s32.totalorder %s24, 0
      %p161 = por %p159, %p160
      %p162 = scmp.ne.s32.totalorder %s148, %s149
      %p163 = scmp.eq.s32.totalorder %s25, 1
      %p164 = por %p162, %p163
      %p166 = scmp.ne.s32.totalorder %s149, %s165
      %p167 = scmp.eq.s32.totalorder %s25, 0
      %p168 = por %p166, %p167
      %s169 = ssub.s32 %s27, %s34
      %p170 = scmp.eq.s32.totalorder %s169, 0
      %s172 = sadd.s32 %s171, 1
      %s173 = scalar_select %p170, %s171, %s172
      %p176 = pneg %p170
      %p177 = scmp.eq.s32.totalorder %s19, 1
      %p178 = por %p176, %p177
      %p179 = scmp.ne.s32.totalorder %s171, %s174
      %p180 = scmp.eq.s32.totalorder %s19, 0
      %p181 = por %p179, %p180
      %p182 = scmp.ne.s32.totalorder %s171, %s174
      %p183 = scmp.eq.s32.totalorder %s24, 1
      %p184 = por %p182, %p183
      %p185 = scmp.ne.s32.totalorder %s174, %s175
      %p186 = scmp.eq.s32.totalorder %s24, 0
      %p187 = por %p185, %p186
      %p188 = scmp.ne.s32.totalorder %s174, %s175
      %p189 = scmp.eq.s32.totalorder %s25, 1
      %p190 = por %p188, %p189
      %p192 = scmp.ne.s32.totalorder %s175, %s191
      %p193 = scmp.eq.s32.totalorder %s25, 0
      %p194 = por %p192, %p193
      %s195 = ssub.s32 %s27, %s34
      %p196 = scmp.eq.s32.totalorder %s195, 0
      %s198 = sadd.s32 %s197, 1
      %s199 = scalar_select %p196, %s197, %s198
      %p202 = pneg %p196
      %p203 = scmp.eq.s32.totalorder %s19, 1
      %p204 = por %p202, %p203
      %p205 = scmp.ne.s32.totalorder %s197, %s200
      %p206 = scmp.eq.s32.totalorder %s19, 0
      %p207 = por %p205, %p206
      %p208 = scmp.ne.s32.totalorder %s197, %s200
      %p209 = scmp.eq.s32.totalorder %s24, 1
      %p210 = por %p208, %p209
      %p211 = scmp.ne.s32.totalorder %s200, %s201
      %p212 = scmp.eq.s32.totalorder %s24, 0
      %p213 = por %p211, %p212
      %p214 = scmp.ne.s32.totalorder %s200, %s201
      %p215 = scmp.eq.s32.totalorder %s25, 1
      %p216 = por %p214, %p215
      %p218 = scmp.ne.s32.totalorder %s201, %s217
      %p219 = scmp.eq.s32.totalorder %s25, 0
      %p220 = por %p218, %p219
      %s221 = ssub.s32 %s27, %s34
      %p222 = scmp.eq.s32.totalorder %s221, 0
      %s224 = sadd.s32 %s223, 1
      %s225 = scalar_select %p222, %s223, %s224
      %p228 = pneg %p222
      %p229 = scmp.eq.s32.totalorder %s19, 1
      %p230 = por %p228, %p229
      %p231 = scmp.ne.s32.totalorder %s223, %s226
      %p232 = scmp.eq.s32.totalorder %s19, 0
      %p233 = por %p231, %p232
      %p234 = scmp.ne.s32.totalorder %s223, %s226
      %p235 = scmp.eq.s32.totalorder %s24, 1
      %p236 = por %p234, %p235
      %p237 = scmp.ne.s32.totalorder %s226, %s227
      %p238 = scmp.eq.s32.totalorder %s24, 0
      %p239 = por %p237, %p238
      %p240 = scmp.ne.s32.totalorder %s226, %s227
      %p241 = scmp.eq.s32.totalorder %s25, 1
      %p242 = por %p240, %p241
      %p244 = scmp.ne.s32.totalorder %s227, %s243
      %p245 = scmp.eq.s32.totalorder %s25, 0
      %p246 = por %p244, %p245
      %s247 = ssub.s32 %s27, %s34
      %p248 = scmp.eq.s32.totalorder %s247, 0
      %s250 = sadd.s32 %s249, 1
      %s251 = scalar_select %p248, %s249, %s250
      %p254 = pneg %p248
      %p255 = scmp.eq.s32.totalorder %s19, 1
      %p256 = por %p254, %p255
      %p257 = scmp.ne.s32.totalorder %s249, %s252
      %p258 = scmp.eq.s32.totalorder %s19, 0
      %p259 = por %p257, %p258
      %p260 = scmp.ne.s32.totalorder %s249, %s252
      %p261 = scmp.eq.s32.totalorder %s24, 1
      %p262 = por %p260, %p261
      %p263 = scmp.ne.s32.totalorder %s252, %s253
      %p264 = scmp.eq.s32.totalorder %s24, 0
      %p265 = por %p263, %p264
      %p266 = scmp.ne.s32.totalorder %s252, %s253
      %p267 = scmp.eq.s32.totalorder %s25, 1
      %p268 = por %p266, %p267
      %p270 = scmp.ne.s32.totalorder %s253, %s269
      %p271 = scmp.eq.s32.totalorder %s25, 0
      %p272 = por %p270, %p271
      %s273 = ssub.s32 %s27, %s34
      %p274 = scmp.eq.s32.totalorder %s273, 0
      %s276 = sadd.s32 %s275, 1
      %s277 = scalar_select %p274, %s275, %s276
      %p280 = pneg %p274
      %p281 = scmp.eq.s32.totalorder %s19, 1
      %p282 = por %p280, %p281
      %p283 = scmp.ne.s32.totalorder %s275, %s278
      %p284 = scmp.eq.s32.totalorder %s19, 0
      %p285 = por %p283, %p284
      %p286 = scmp.ne.s32.totalorder %s275, %s278
      %p287 = scmp.eq.s32.totalorder %s24, 1
      %p288 = por %p286, %p287
      %p289 = scmp.ne.s32.totalorder %s278, %s279
      %p290 = scmp.eq.s32.totalorder %s24, 0
      %p291 = por %p289, %p290
      %p292 = scmp.ne.s32.totalorder %s278, %s279
      %p293 = scmp.eq.s32.totalorder %s25, 1
      %p294 = por %p292, %p293
      %p296 = scmp.ne.s32.totalorder %s279, %s295
      %p297 = scmp.eq.s32.totalorder %s25, 0
      %p298 = por %p296, %p297
      %s299 = ssub.s32 %s27, %s34
      %p300 = scmp.eq.s32.totalorder %s299, 0
      %s302 = sadd.s32 %s301, 1
      %s303 = scalar_select %p300, %s301, %s302
      %p306 = pneg %p300
      %p307 = scmp.eq.s32.totalorder %s19, 1
      %p308 = por %p306, %p307
      %p309 = scmp.ne.s32.totalorder %s301, %s304
      %p310 = scmp.eq.s32.totalorder %s19, 0
      %p311 = por %p309, %p310
      %p312 = scmp.ne.s32.totalorder %s301, %s304
      %p313 = scmp.eq.s32.totalorder %s24, 1
      %p314 = por %p312, %p313
      %p315 = scmp.ne.s32.totalorder %s304, %s305
      %p316 = scmp.eq.s32.totalorder %s24, 0
      %p317 = por %p315, %p316
      %p318 = scmp.ne.s32.totalorder %s304, %s305
      %p319 = scmp.eq.s32.totalorder %s25, 1
      %p320 = por %p318, %p319
      %p322 = scmp.ne.s32.totalorder %s305, %s321
      %p323 = scmp.eq.s32.totalorder %s25, 0
      %p324 = por %p322, %p323
      %s325 = ssub.s32 %s27, %s34
      %p326 = scmp.eq.s32.totalorder %s325, 0
      %s328 = sadd.s32 %s327, 1
      %s329 = scalar_select %p326, %s327, %s328
      %p332 = pneg %p326
      %p333 = scmp.eq.s32.totalorder %s19, 1
      %p334 = por %p332, %p333
      %p335 = scmp.ne.s32.totalorder %s327, %s330
      %p336 = scmp.eq.s32.totalorder %s19, 0
      %p337 = por %p335, %p336
      %p338 = scmp.ne.s32.totalorder %s327, %s330
      %p339 = scmp.eq.s32.totalorder %s24, 1
      %p340 = por %p338, %p339
      %p341 = scmp.ne.s32.totalorder %s330, %s331
      %p342 = scmp.eq.s32.totalorder %s24, 0
      %p343 = por %p341, %p342
      %p344 = scmp.ne.s32.totalorder %s330, %s331
      %p345 = scmp.eq.s32.totalorder %s25, 1
      %p346 = por %p344, %p345
      %p348 = scmp.ne.s32.totalorder %s331, %s347
      %p349 = scmp.eq.s32.totalorder %s25, 0
      %p350 = por %p348, %p349
      %s351 = ssub.s32 %s26, %s38
      %p352 = scmp.eq.s32.totalorder %s351, 0
      %s354 = sadd.s32 %s353, 1
      %s355 = scalar_select %p352, %s353, %s354
      %p358 = pneg %p352
      %p359 = scmp.eq.s32.totalorder %s19, 1
      %p360 = por %p358, %p359
      %p361 = scmp.ne.s32.totalorder %s353, %s356
      %p362 = scmp.eq.s32.totalorder %s19, 0
      %p363 = por %p361, %p362
      %p364 = scmp.ne.s32.totalorder %s353, %s356
      %p365 = scmp.eq.s32.totalorder %s24, 1
      %p366 = por %p364, %p365
      %p367 = scmp.ne.s32.totalorder %s356, %s357
      %p368 = scmp.eq.s32.totalorder %s24, 0
      %p369 = por %p367, %p368
      %p370 = scmp.ne.s32.totalorder %s356, %s357
      %p371 = scmp.eq.s32.totalorder %s25, 1
      %p372 = por %p370, %p371
      %p374 = scmp.ne.s32.totalorder %s357, %s373
      %p375 = scmp.eq.s32.totalorder %s25, 0
      %p376 = por %p374, %p375
      %p377 = scmp.le.s32.totalorder 1, %s19
      %p378 = scmp.lt.s32.totalorder %s19, 3
      %p379 = pnand %p377, %p378
      %p380 = pneg %p379
      // Predicated region
      $region9: #{tpu_custom_call.1} parent=5 // pred_check
        _
      $region10: #{tpu_custom_call.1} parent=5 // pred_check_branch
        %382 = sbr.rel (%p379) target = $region12
      $region11: #{tpu_custom_call.1} parent=5 // pred_region
        %s383 = ssub.s32 %s19, 1
        // Predicated region
        $region13: #{tpu_custom_call.1} parent=11 // pred_check
          %p384 = pneg %p57
        $region14: #{tpu_custom_call.1} parent=11 // pred_check_branch
          %386 = sbr.rel (%p384) target = $region16
        $region15: #{tpu_custom_call.1} parent=11 // pred_region
          %s387 = smul.u32 2, %s28
          %p388 = scmp.lt.s32.totalorder %s387, 1
          %s389 = scalar_select %p388, %s387, 1
          %s390 = smul.addr %s389, 8
          %s391 = scalar_lea.vmem %s0, %s390
          %s392 = smul.u32 2, %s28
        $region16: #{tpu_custom_call.1} parent=11 // pred_fallthru
          _
      $region12: #{tpu_custom_call.1} parent=5 // pred_fallthru
        _
      %p393 = scmp.lt.s32.totalorder %s19, 2
      // Predicated region
      $region17: #{tpu_custom_call.1} parent=5 // pred_check
        %p394 = pneg %p393
      $region18: #{tpu_custom_call.1} parent=5 // pred_check_branch
        %396 = sbr.rel (%p394) target = $region20
      $region19: #{tpu_custom_call.1} parent=5 // pred_region
        // Predicated region
        $region21: #{tpu_custom_call.1} parent=19 // pred_check
          %p397 = pneg %p77
        $region22: #{tpu_custom_call.1} parent=19 // pred_check_branch
          %399 = sbr.rel (%p397) target = $region24
        $region23: #{tpu_custom_call.1} parent=19 // pred_region
          %p400 = scmp.lt.s32.totalorder %s27, 1
          %s401 = scalar_select %p400, %s27, 1
          %s402 = scalar_lea.vmem %s1, %s401
        $region24: #{tpu_custom_call.1} parent=19 // pred_fallthru
          _
        // Predicated region
        $region25: #{tpu_custom_call.1} parent=19 // pred_check
          %p403 = pneg %p103
        $region26: #{tpu_custom_call.1} parent=19 // pred_check_branch
          %405 = sbr.rel (%p403) target = $region28
        $region27: #{tpu_custom_call.1} parent=19 // pred_region
          %p406 = scmp.lt.s32.totalorder %s27, 1
          %s407 = scalar_select %p406, %s27, 1
          %s408 = scalar_lea.vmem %s2, %s407
        $region28: #{tpu_custom_call.1} parent=19 // pred_fallthru
          _
        // Predicated region
        $region29: #{tpu_custom_call.1} parent=19 // pred_check
          %p409 = pneg %p129
        $region30: #{tpu_custom_call.1} parent=19 // pred_check_branch
          %411 = sbr.rel (%p409) target = $region32
        $region31: #{tpu_custom_call.1} parent=19 // pred_region
          %p412 = scmp.lt.s32.totalorder %s27, 1
          %s413 = scalar_select %p412, %s27, 1
          %s414 = smul.addr %s413, 8
          %s415 = smul.addr %s414, 4
          %s416 = scalar_lea.vmem %s3, %s415
        $region32: #{tpu_custom_call.1} parent=19 // pred_fallthru
          _
        // Predicated region
        $region33: #{tpu_custom_call.1} parent=19 // pred_check
          %p417 = pneg %p155
        $region34: #{tpu_custom_call.1} parent=19 // pred_check_branch
          %419 = sbr.rel (%p417) target = $region36
        $region35: #{tpu_custom_call.1} parent=19 // pred_region
          %p420 = scmp.lt.s32.totalorder %s27, 1
          %s421 = scalar_select %p420, %s27, 1
          %s422 = smul.addr %s421, 8
          %s423 = smul.addr %s422, 4
          %s424 = scalar_lea.vmem %s4, %s423
        $region36: #{tpu_custom_call.1} parent=19 // pred_fallthru
          _
        // Predicated region
        $region37: #{tpu_custom_call.1} parent=19 // pred_check
          %p425 = pneg %p181
        $region38: #{tpu_custom_call.1} parent=19 // pred_check_branch
          %427 = sbr.rel (%p425) target = $region40
        $region39: #{tpu_custom_call.1} parent=19 // pred_region
          %p428 = scmp.lt.s32.totalorder %s27, 1
          %s429 = scalar_select %p428, %s27, 1
          %s430 = scalar_lea.vmem %s5, %s429
        $region40: #{tpu_custom_call.1} parent=19 // pred_fallthru
          _
        // Predicated region
        $region41: #{tpu_custom_call.1} parent=19 // pred_check
          %p431 = pneg %p207
        $region42: #{tpu_custom_call.1} parent=19 // pred_check_branch
          %433 = sbr.rel (%p431) target = $region44
        $region43: #{tpu_custom_call.1} parent=19 // pred_region
          %p434 = scmp.lt.s32.totalorder %s27, 1
          %s435 = scalar_select %p434, %s27, 1
          %s436 = scalar_lea.vmem %s6, %s435
        $region44: #{tpu_custom_call.1} parent=19 // pred_fallthru
          _
        // Predicated region
        $region45: #{tpu_custom_call.1} parent=19 // pred_check
          %p437 = pneg %p233
        $region46: #{tpu_custom_call.1} parent=19 // pred_check_branch
          %439 = sbr.rel (%p437) target = $region48
        $region47: #{tpu_custom_call.1} parent=19 // pred_region
          %p440 = scmp.lt.s32.totalorder %s27, 1
          %s441 = scalar_select %p440, %s27, 1
          %s442 = scalar_lea.vmem %s7, %s441
        $region48: #{tpu_custom_call.1} parent=19 // pred_fallthru
          _
        // Predicated region
        $region49: #{tpu_custom_call.1} parent=19 // pred_check
          %p443 = pneg %p259
        $region50: #{tpu_custom_call.1} parent=19 // pred_check_branch
          %445 = sbr.rel (%p443) target = $region52
        $region51: #{tpu_custom_call.1} parent=19 // pred_region
          %p446 = scmp.lt.s32.totalorder %s27, 1
          %s447 = scalar_select %p446, %s27, 1
          %s448 = smul.addr %s447, 4
          %s449 = smul.addr %s448, 4
          %s450 = scalar_lea.vmem %s8, %s449
        $region52: #{tpu_custom_call.1} parent=19 // pred_fallthru
          _
        // Predicated region
        $region53: #{tpu_custom_call.1} parent=19 // pred_check
          %p451 = pneg %p285
        $region54: #{tpu_custom_call.1} parent=19 // pred_check_branch
          %453 = sbr.rel (%p451) target = $region56
        $region55: #{tpu_custom_call.1} parent=19 // pred_region
          %p454 = scmp.lt.s32.totalorder %s27, 1
          %s455 = scalar_select %p454, %s27, 1
          %s456 = scalar_lea.vmem %s9, %s455
        $region56: #{tpu_custom_call.1} parent=19 // pred_fallthru
          _
        // Predicated region
        $region57: #{tpu_custom_call.1} parent=19 // pred_check
          %p457 = pneg %p311
        $region58: #{tpu_custom_call.1} parent=19 // pred_check_branch
          %459 = sbr.rel (%p457) target = $region60
        $region59: #{tpu_custom_call.1} parent=19 // pred_region
          %p460 = scmp.lt.s32.totalorder %s27, 1
          %s461 = scalar_select %p460, %s27, 1
          %s462 = smul.addr %s461, 8
          %s463 = smul.addr %s462, 4
          %s464 = scalar_lea.vmem %s10, %s463
        $region60: #{tpu_custom_call.1} parent=19 // pred_fallthru
          _
        // Predicated region
        $region61: #{tpu_custom_call.1} parent=19 // pred_check
          %p465 = pneg %p337
        $region62: #{tpu_custom_call.1} parent=19 // pred_check_branch
          %467 = sbr.rel (%p465) target = $region64
        $region63: #{tpu_custom_call.1} parent=19 // pred_region
          %p468 = scmp.lt.s32.totalorder %s27, 1
          %s469 = scalar_select %p468, %s27, 1
          %s470 = scalar_lea.vmem %s11, %s469
        $region64: #{tpu_custom_call.1} parent=19 // pred_fallthru
          _
      $region20: #{tpu_custom_call.1} parent=5 // pred_fallthru
        _
      %p471 = scmp.le.s32.totalorder 1, %s19
      %p472 = scmp.lt.s32.totalorder %s19, 3
      %p473 = pnand %p471, %p472
      %p474 = pneg %p473
      // Predicated region
      $region65: #{tpu_custom_call.1} parent=5 // pred_check
        _
      $region66: #{tpu_custom_call.1} parent=5 // pred_check_branch
        %476 = sbr.rel (%p473) target = $region68
      $region67: #{tpu_custom_call.1} parent=5 // pred_region
        %s477 = ssub.s32 %s19, 1
        %s478 = smul.u32 2, %s28
        %p479 = scmp.lt.s32.totalorder %s478, 1
        %s480 = scalar_select %p479, %s478, 1
        %s481 = smul.addr %s480, 8
        %s482 = scalar_lea.vmem %s0, %s481
        %p483 = pneg %p57
        %p484 = pneg %p54
        %p485 = scmp.lt.s32.totalorder %s29, 1
        %s486 = scalar_select %p485, %s29, 1
        %s487 = scalar_lea.vmem %s1, %s486
        %p488 = pneg %p83
        %p489 = pneg %p80
        %p490 = scmp.lt.s32.totalorder %s29, 1
        %s491 = scalar_select %p490, %s29, 1
        %s492 = scalar_lea.vmem %s2, %s491
        %p493 = pneg %p109
        %p494 = pneg %p106
        %p495 = scmp.lt.s32.totalorder %s29, 1
        %s496 = scalar_select %p495, %s29, 1
        %s497 = smul.addr %s496, 8
        %s498 = smul.addr %s497, 4
        %s499 = scalar_lea.vmem %s3, %s498
        %p500 = pneg %p135
        %p501 = pneg %p132
        %p502 = scmp.lt.s32.totalorder %s29, 1
        %s503 = scalar_select %p502, %s29, 1
        %s504 = smul.addr %s503, 8
        %s505 = smul.addr %s504, 4
        %s506 = scalar_lea.vmem %s4, %s505
        %p507 = pneg %p161
        %p508 = pneg %p158
        %p509 = scmp.lt.s32.totalorder %s29, 1
        %s510 = scalar_select %p509, %s29, 1
        %s511 = scalar_lea.vmem %s5, %s510
        %p512 = pneg %p187
        %p513 = pneg %p184
        %p514 = scmp.lt.s32.totalorder %s29, 1
        %s515 = scalar_select %p514, %s29, 1
        %s516 = scalar_lea.vmem %s6, %s515
        %p517 = pneg %p213
        %p518 = pneg %p210
        %p519 = scmp.lt.s32.totalorder %s29, 1
        %s520 = scalar_select %p519, %s29, 1
        %s521 = scalar_lea.vmem %s7, %s520
        %p522 = pneg %p239
        %p523 = pneg %p236
        %p524 = scmp.lt.s32.totalorder %s29, 1
        %s525 = scalar_select %p524, %s29, 1
        %s526 = smul.addr %s525, 4
        %s527 = smul.addr %s526, 4
        %s528 = scalar_lea.vmem %s8, %s527
        %p529 = pneg %p265
        %p530 = pneg %p262
        %p531 = scmp.lt.s32.totalorder %s29, 1
        %s532 = scalar_select %p531, %s29, 1
        %s533 = scalar_lea.vmem %s9, %s532
        %p534 = pneg %p291
        %p535 = pneg %p288
        %p536 = scmp.lt.s32.totalorder %s29, 1
        %s537 = scalar_select %p536, %s29, 1
        %s538 = smul.addr %s537, 8
        %s539 = smul.addr %s538, 4
        %s540 = scalar_lea.vmem %s10, %s539
        %p541 = pneg %p317
        %p542 = pneg %p314
        %p543 = scmp.lt.s32.totalorder %s29, 1
        %s544 = scalar_select %p543, %s29, 1
        %s545 = scalar_lea.vmem %s11, %s544
        %p546 = pneg %p343
        %p547 = pneg %p340
        %p548 = pneg %p369
        %p549 = pneg %p366
        %s550 = smul.u32 2, %s28
        %p551 = scmp.lt.s32.totalorder %s550, 1
        %s552 = scalar_select %p551, %s550, 1
        %s553 = smul.addr %s552, 8
        %s554 = scalar_lea.vmem %s0, %s553
        %s555 = smul.u32 2, %s28
        %p556 = scmp.lt.s32.totalorder %s29, 1
        %s557 = scalar_select %p556, %s29, 1
        %s558 = scalar_lea.vmem %s1, %s557
        %p559 = scmp.lt.s32.totalorder %s29, 1
        %s560 = scalar_select %p559, %s29, 1
        %s561 = scalar_lea.vmem %s2, %s560
        %p562 = scmp.lt.s32.totalorder %s29, 1
        %s563 = scalar_select %p562, %s29, 1
        %s564 = smul.addr %s563, 8
        %s565 = smul.addr %s564, 4
        %s566 = scalar_lea.vmem %s3, %s565
        %p567 = scmp.lt.s32.totalorder %s29, 1
        %s568 = scalar_select %p567, %s29, 1
        %s569 = smul.addr %s568, 8
        %s570 = smul.addr %s569, 4
        %s571 = scalar_lea.vmem %s4, %s570
        %p572 = scmp.lt.s32.totalorder %s29, 1
        %s573 = scalar_select %p572, %s29, 1
        %s574 = scalar_lea.vmem %s5, %s573
        %p575 = scmp.lt.s32.totalorder %s29, 1
        %s576 = scalar_select %p575, %s29, 1
        %s577 = scalar_lea.vmem %s6, %s576
        %p578 = scmp.lt.s32.totalorder %s29, 1
        %s579 = scalar_select %p578, %s29, 1
        %s580 = scalar_lea.vmem %s7, %s579
        %p581 = scmp.lt.s32.totalorder %s29, 1
        %s582 = scalar_select %p581, %s29, 1
        %s583 = smul.addr %s582, 4
        %s584 = smul.addr %s583, 4
        %s585 = scalar_lea.vmem %s8, %s584
        %p586 = scmp.lt.s32.totalorder %s29, 1
        %s587 = scalar_select %p586, %s29, 1
        %s588 = scalar_lea.vmem %s9, %s587
        %p589 = scmp.lt.s32.totalorder %s29, 1
        %s590 = scalar_select %p589, %s29, 1
        %s591 = smul.addr %s590, 8
        %s592 = smul.addr %s591, 4
        %s593 = scalar_lea.vmem %s10, %s592
        %p594 = scmp.lt.s32.totalorder %s29, 1
        %s595 = scalar_select %p594, %s29, 1
        %s596 = scalar_lea.vmem %s11, %s595
        %s597 = smul.u32 2, %s28
        %p599 = scmp.eq.s32.totalorder %s29, 0
        // Predicated region
        $region69: #{tpu_custom_call.1} parent=67 // pred_check
          %p600 = pneg %p599
        $region70: #{tpu_custom_call.1} parent=67 // pred_check_branch
          %602 = sbr.rel (%p600) target = $region72
        $region71: #{tpu_custom_call.1} parent=67 // pred_region
          %v603 = vld [vmem:[%s554] sm:$0xff]
          %v604 = vld [vmem:[%s554 + $0x8] sm:$0xff]
          %vm605 = vcmask 261120
          %606 = vst.msk [vmem:[#allocation2] sm:$0xff] %vm605, %v603
          %607 = vst.msk [vmem:[#allocation2 + $0x8] sm:$0xff] %vm605, %v604
        $region72: #{tpu_custom_call.1} parent=67 // pred_fallthru
          _
        %v608 = vld [vmem:[#allocation2] sm:$0xff]
        %v609 = vld [vmem:[#allocation2 + $0x8] sm:$0xff]
        %vm610 = vcmask 261120
        %v611 = vsel %vm610, %v608, 0.0
        %612 = vadd.xlane.f32.xlu0 %v611
        %v613 = vpop.xlane.xlu0 %612
        %v614 = vsel %vm610, %v609, 0.0
        %615 = vadd.xlane.f32.xlu0 %v614
        %v616 = vpop.xlane.xlu0 %615
        %v617 = vrcp.pop 32.0
        %v618 = vmul.f32 %v613, %v617
        %v619 = vmul.f32 %v616, %v617
        %v620 = vsub.f32 %v608, %v618
        %v621 = vsub.f32 %v609, %v619
        %v622 = vmul.f32 %v620, %v620
        %v623 = vmul.f32 %v621, %v621
        %v624 = vsel %vm610, %v622, 0.0
        %625 = vadd.xlane.f32.xlu0 %v624
        %v626 = vpop.xlane.xlu0 %625
        %v627 = vsel %vm610, %v623, 0.0
        %628 = vadd.xlane.f32.xlu0 %v627
        %v629 = vpop.xlane.xlu0 %628
        %v630 = vmul.f32 %v626, %v617
        %v631 = vmul.f32 %v629, %v617
        %v632 = vadd.f32 %v630, 1e-05
        %v633 = vadd.f32 %v631, 1e-05
        %v634 = vrsqrt.pop %v632
        %v635 = vrsqrt.pop %v633
        %v636 = vmul.f32 %v620, %v634
        %v637 = vmul.f32 %v621, %v635
        %v638 = vld [vmem:[%s558] sm:$0x1]
        %v640 = vlaneseq
        %v641 = vshrl.u32 %v640, 7
        %v642 = vsub.s32 0, %v641
        %v643 = vrot.slane %v638, %v642
        %v645 = vmul.f32 %v636, %v643
        %v646 = vmul.f32 %v637, %v643
        %v647 = vld [vmem:[%s561] sm:$0x1]
        %v649 = vlaneseq
        %v650 = vshrl.u32 %v649, 7
        %v651 = vsub.s32 0, %v650
        %v652 = vrot.slane %v647, %v651
        %v654 = vadd.f32 %v645, %v652
        %v655 = vadd.f32 %v646, %v652
        %v656 = vpack.c.bf16 %v655, %v654
        %v657 = vld [vmem:[%s566] sm:$0xff]
        %v658 = vld [vmem:[%s566 + $0x8] sm:$0xff]
        %v659 = vld [vmem:[%s566 + $0x10] sm:$0xff]
        %v660 = vld [vmem:[%s566 + $0x18] sm:$0xff]
        %v665 = vunpack.c.l.b16 %v657
        %v666 = vunpack.c.h.b16 %v657
        %v667 = vunpack.c.l.b16 %v658
        %v668 = vunpack.c.h.b16 %v658
        %v669 = vunpack.c.l.b16 %v659
        %v670 = vunpack.c.h.b16 %v659
        %v671 = vunpack.c.l.b16 %v660
        %v672 = vunpack.c.h.b16 %v660
        %v673 = vpack.c.b16 %v667, %v665
        %v674 = vpack.c.b16 %v668, %v666
        %v675 = vpack.c.b16 %v671, %v669
        %v676 = vpack.c.b16 %v672, %v670
        %v682 = vsel %vm610, %v656, 0
        %684 = vmatprep.subr.bf16.mxu0 %v674
        %685 = vmatpush1.bf16.msra.mxu0 %v673
        %686 = vmatprep.subr.bf16.mxu0 %v676
        %687 = vmatpush1.bf16.msra.mxu0 %v675
        %688 = vmatprep.subr.bf16.mxu0 0
        %689 = vmatpush1.bf16.msra.mxu0 0
        %690 = vmatprep.subr.bf16.mxu0 0
        %691 = vmatpush1.bf16.msra.mxu0 0
        %692 = vmatprep.subr.bf16.mxu0 0
        %693 = vmatpush1.bf16.msra.mxu0 0
        %694 = vmatprep.subr.bf16.mxu0 0
        %695 = vmatpush1.bf16.msra.mxu0 0
        %696 = vmatprep.subr.bf16.mxu0 0
        %697 = vmatpush1.bf16.msra.mxu0 0
        %698 = vmatprep.subr.bf16.mxu0 0
        %699 = vmatpush1.bf16.msra.mxu0 0
        %700 = vmatprep.subr.bf16.mxu0 0
        %701 = vmatpush1.bf16.msra.mxu0 0
        %702 = vmatprep.subr.bf16.mxu0 0
        %703 = vmatpush1.bf16.msra.mxu0 0
        %704 = vmatprep.subr.bf16.mxu0 0
        %705 = vmatpush1.bf16.msra.mxu0 0
        %706 = vmatprep.subr.bf16.mxu0 0
        %707 = vmatpush1.bf16.msra.mxu0 0
        %708 = vmatprep.subr.bf16.mxu0 0
        %709 = vmatpush1.bf16.msra.mxu0 0
        %710 = vmatprep.subr.bf16.mxu0 0
        %711 = vmatpush1.bf16.msra.mxu0 0
        %712 = vmatprep.subr.bf16.mxu0 0
        %713 = vmatpush1.bf16.msra.mxu0 0
        %714 = vmatprep.subr.bf16.mxu0 0
        %715 = vmatpush1.bf16.msra.mxu0 0
        %716 = vmatprep.mubr.bf16.mxu0 0
        %717 = vmatmul.mubr.bf16.gmra.mrb[0].mxu0 %v682
        %v718 = vpop.f32.mrb[0].mxu0
        %v719 = vadd.f32 0.0, %v718
        %v720 = vpop.f32.mrb[0].mxu0
        %v721 = vadd.f32 0.0, %v720
        %v722 = vpop.f32.mrb[0].mxu0
        %v723 = vadd.f32 0.0, %v722
        %v724 = vpop.f32.mrb[0].mxu0
        %v725 = vadd.f32 0.0, %v724
        %726 = vdwg.mxu0
        %v727 = vpack.c.bf16 %v723, %v719
        %v728 = vpack.c.bf16 %v725, %v721
        %v731 = vunpack.c.l.b16 %v727
        %v732 = vunpack.c.l.b16 %v728
        %v733 = vunpack.c.h.b16 %v727
        %v734 = vunpack.c.h.b16 %v728
        %v735 = vpack.c.b16 %v732, %v731
        %v736 = vpack.c.b16 %v734, %v733
        %v737 = vpack.c.b16 %v731, %v731
        %738 = vrot.lane.b32.xlu0 %v737, 64
        %v739 = vpop.permute.xlu0 %738
        %vm740 = vcmask 130048
        %v742 = vsel %vm740, %v735, 0
        %v745 = vsel %vm740, %v739, 0
        %747 = vmatprep.subr.bf16.mxu0 0
        %748 = vmatpush1.bf16.xpose.msra.mxu0 %v745
        %749 = vmatprep.subr.bf16.mxu0 0
        %750 = vmatpush1.bf16.xpose.msra.mxu0 0
        %751 = vmatprep.subr.bf16.mxu0 0
        %752 = vmatpush1.bf16.xpose.msra.mxu0 0
        %753 = vmatprep.subr.bf16.mxu0 0
        %754 = vmatpush1.bf16.xpose.msra.mxu0 0
        %755 = vmatprep.subr.bf16.mxu0 0
        %756 = vmatpush1.bf16.xpose.msra.mxu0 0
        %757 = vmatprep.subr.bf16.mxu0 0
        %758 = vmatpush1.bf16.xpose.msra.mxu0 0
        %759 = vmatprep.subr.bf16.mxu0 0
        %760 = vmatpush1.bf16.xpose.msra.mxu0 0
        %761 = vmatprep.subr.bf16.mxu0 0
        %762 = vmatpush1.bf16.xpose.msra.mxu0 0
        %763 = vmatprep.subr.bf16.mxu0 0
        %764 = vmatpush1.bf16.xpose.msra.mxu0 0
        %765 = vmatprep.subr.bf16.mxu0 0
        %766 = vmatpush1.bf16.xpose.msra.mxu0 0
        %767 = vmatprep.subr.bf16.mxu0 0
        %768 = vmatpush1.bf16.xpose.msra.mxu0 0
        %769 = vmatprep.subr.bf16.mxu0 0
        %770 = vmatpush1.bf16.xpose.msra.mxu0 0
        %771 = vmatprep.subr.bf16.mxu0 0
        %772 = vmatpush1.bf16.xpose.msra.mxu0 0
        %773 = vmatprep.subr.bf16.mxu0 0
        %774 = vmatpush1.bf16.xpose.msra.mxu0 0
        %775 = vmatprep.subr.bf16.mxu0 0
        %776 = vmatpush1.bf16.xpose.msra.mxu0 0
        %777 = vmatprep.subr.bf16.mxu0 0
        %778 = vmatpush1.bf16.xpose.msra.mxu0 0
        %779 = vmatprep.mubr.bf16.mxu0 0
        %780 = vmatmul.mubr.bf16.gmra.mrb[0].mxu0 %v742
        %v781 = vpop.f32.mrb[0].mxu0
        %v782 = vadd.f32 0.0, %v781
        %v783 = vpop.f32.mrb[0].mxu0
        %v784 = vpop.f32.mrb[0].mxu0
        %v785 = vpop.f32.mrb[0].mxu0
        %786 = vdwg.mxu0
        %v787 = vpack.c.b16 %v733, %v733
        %788 = vrot.lane.b32.xlu0 %v787, 64
        %v789 = vpop.permute.xlu0 %788
        %v791 = vsel %vm740, %v736, 0
        %v794 = vsel %vm740, %v789, 0
        %796 = vmatprep.subr.bf16.mxu0 0
        %797 = vmatpush1.bf16.xpose.msra.mxu0 %v794
        %798 = vmatprep.subr.bf16.mxu0 0
        %799 = vmatpush1.bf16.xpose.msra.mxu0 0
        %800 = vmatprep.subr.bf16.mxu0 0
        %801 = vmatpush1.bf16.xpose.msra.mxu0 0
        %802 = vmatprep.subr.bf16.mxu0 0
        %803 = vmatpush1.bf16.xpose.msra.mxu0 0
        %804 = vmatprep.subr.bf16.mxu0 0
        %805 = vmatpush1.bf16.xpose.msra.mxu0 0
        %806 = vmatprep.subr.bf16.mxu0 0
        %807 = vmatpush1.bf16.xpose.msra.mxu0 0
        %808 = vmatprep.subr.bf16.mxu0 0
        %809 = vmatpush1.bf16.xpose.msra.mxu0 0
        %810 = vmatprep.subr.bf16.mxu0 0
        %811 = vmatpush1.bf16.xpose.msra.mxu0 0
        %812 = vmatprep.subr.bf16.mxu0 0
        %813 = vmatpush1.bf16.xpose.msra.mxu0 0
        %814 = vmatprep.subr.bf16.mxu0 0
        %815 = vmatpush1.bf16.xpose.msra.mxu0 0
        %816 = vmatprep.subr.bf16.mxu0 0
        %817 = vmatpush1.bf16.xpose.msra.mxu0 0
        %818 = vmatprep.subr.bf16.mxu0 0
        %819 = vmatpush1.bf16.xpose.msra.mxu0 0
        %820 = vmatprep.subr.bf16.mxu0 0
        %821 = vmatpush1.bf16.xpose.msra.mxu0 0
        %822 = vmatprep.subr.bf16.mxu0 0
        %823 = vmatpush1.bf16.xpose.msra.mxu0 0
        %824 = vmatprep.subr.bf16.mxu0 0
        %825 = vmatpush1.bf16.xpose.msra.mxu0 0
        %826 = vmatprep.subr.bf16.mxu0 0
        %827 = vmatpush1.bf16.xpose.msra.mxu0 0
        %828 = vmatprep.mubr.bf16.mxu0 0
        %829 = vmatmul.mubr.bf16.gmra.mrb[0].mxu0 %v791
        %v830 = vpop.f32.mrb[0].mxu0
        %v831 = vadd.f32 0.0, %v830
        %v832 = vpop.f32.mrb[0].mxu0
        %v833 = vpop.f32.mrb[0].mxu0
        %v834 = vpop.f32.mrb[0].mxu0
        %835 = vdwg.mxu0
        %vm836 = vcmask 64512
        %v837 = vsel %vm836, %v782, -inf
        %838 = vmax.xlane.f32.xlu0 %v837
        %v839 = vpop.xlane.xlu0 %838
        %v840 = vsel %vm836, %v831, -inf
        %841 = vmax.xlane.f32.xlu0 %v840
        %v842 = vpop.xlane.xlu0 %841
        %v843 = vsub.f32 %v782, %v839
        %v844 = vsub.f32 %v831, %v842
        %v845 = vmul.f32 %v843, 1.442695
        %v846 = vpow.pop %v845
        %v847 = vmul.f32 %v844, 1.442695
        %v848 = vpow.pop %v847
        %v849 = vsel %vm836, %v846, 0.0
        %850 = vadd.xlane.f32.xlu0 %v849
        %v851 = vpop.xlane.xlu0 %850
        %v852 = vsel %vm836, %v848, 0.0
        %853 = vadd.xlane.f32.xlu0 %v852
        %v854 = vpop.xlane.xlu0 %853
        %v855 = vrcp.pop %v851
        %v856 = vrcp.pop %v854
        %v857 = vmul.f32 %v846, %v855
        %v858 = vmul.f32 %v848, %v856
        %v859 = vpack.c.bf16 %v857, %v857
        %v860 = vpack.c.bf16 %v858, %v858
        %v861 = vrot.slane %v735, 4
        %v863 = vsel %vm836, %v859, 0
        %vm865 = vcmask 1043456
        %v867 = vsel %vm865, %v861, 0
        %869 = vmatprep.subr.bf16.mxu0 0
        %870 = vmatpush1.bf16.msra.mxu0 %v867
        %871 = vmatprep.subr.bf16.mxu0 0
        %872 = vmatpush1.bf16.msra.mxu0 0
        %873 = vmatprep.subr.bf16.mxu0 0
        %874 = vmatpush1.bf16.msra.mxu0 0
        %875 = vmatprep.subr.bf16.mxu0 0
        %876 = vmatpush1.bf16.msra.mxu0 0
        %877 = vmatprep.subr.bf16.mxu0 0
        %878 = vmatpush1.bf16.msra.mxu0 0
        %879 = vmatprep.subr.bf16.mxu0 0
        %880 = vmatpush1.bf16.msra.mxu0 0
        %881 = vmatprep.subr.bf16.mxu0 0
        %882 = vmatpush1.bf16.msra.mxu0 0
        %883 = vmatprep.subr.bf16.mxu0 0
        %884 = vmatpush1.bf16.msra.mxu0 0
        %885 = vmatprep.subr.bf16.mxu0 0
        %886 = vmatpush1.bf16.msra.mxu0 0
        %887 = vmatprep.subr.bf16.mxu0 0
        %888 = vmatpush1.bf16.msra.mxu0 0
        %889 = vmatprep.subr.bf16.mxu0 0
        %890 = vmatpush1.bf16.msra.mxu0 0
        %891 = vmatprep.subr.bf16.mxu0 0
        %892 = vmatpush1.bf16.msra.mxu0 0
        %893 = vmatprep.subr.bf16.mxu0 0
        %894 = vmatpush1.bf16.msra.mxu0 0
        %895 = vmatprep.subr.bf16.mxu0 0
        %896 = vmatpush1.bf16.msra.mxu0 0
        %897 = vmatprep.subr.bf16.mxu0 0
        %898 = vmatpush1.bf16.msra.mxu0 0
        %899 = vmatprep.subr.bf16.mxu0 0
        %900 = vmatpush1.bf16.msra.mxu0 0
        %901 = vmatprep.mubr.bf16.mxu0 0
        %902 = vmatmul.mubr.bf16.gmra.mrb[0].mxu0 %v863
        %v903 = vpop.f32.mrb[0].mxu0
        %v904 = vadd.f32 0.0, %v903
        %v905 = vpop.f32.mrb[0].mxu0
        %v906 = vpop.f32.mrb[0].mxu0
        %v907 = vpop.f32.mrb[0].mxu0
        %908 = vdwg.mxu0
        %v909 = vrot.slane %v736, 4
        %v911 = vsel %vm836, %v860, 0
        %v914 = vsel %vm865, %v909, 0
        %916 = vmatprep.subr.bf16.mxu0 0
        %917 = vmatpush1.bf16.msra.mxu0 %v914
        %918 = vmatprep.subr.bf16.mxu0 0
        %919 = vmatpush1.bf16.msra.mxu0 0
        %920 = vmatprep.subr.bf16.mxu0 0
        %921 = vmatpush1.bf16.msra.mxu0 0
        %922 = vmatprep.subr.bf16.mxu0 0
        %923 = vmatpush1.bf16.msra.mxu0 0
        %924 = vmatprep.subr.bf16.mxu0 0
        %925 = vmatpush1.bf16.msra.mxu0 0
        %926 = vmatprep.subr.bf16.mxu0 0
        %927 = vmatpush1.bf16.msra.mxu0 0
        %928 = vmatprep.subr.bf16.mxu0 0
        %929 = vmatpush1.bf16.msra.mxu0 0
        %930 = vmatprep.subr.bf16.mxu0 0
        %931 = vmatpush1.bf16.msra.mxu0 0
        %932 = vmatprep.subr.bf16.mxu0 0
        %933 = vmatpush1.bf16.msra.mxu0 0
        %934 = vmatprep.subr.bf16.mxu0 0
        %935 = vmatpush1.bf16.msra.mxu0 0
        %936 = vmatprep.subr.bf16.mxu0 0
        %937 = vmatpush1.bf16.msra.mxu0 0
        %938 = vmatprep.subr.bf16.mxu0 0
        %939 = vmatpush1.bf16.msra.mxu0 0
        %940 = vmatprep.subr.bf16.mxu0 0
        %941 = vmatpush1.bf16.msra.mxu0 0
        %942 = vmatprep.subr.bf16.mxu0 0
        %943 = vmatpush1.bf16.msra.mxu0 0
        %944 = vmatprep.subr.bf16.mxu0 0
        %945 = vmatpush1.bf16.msra.mxu0 0
        %946 = vmatprep.subr.bf16.mxu0 0
        %947 = vmatpush1.bf16.msra.mxu0 0
        %948 = vmatprep.mubr.bf16.mxu0 0
        %949 = vmatmul.mubr.bf16.gmra.mrb[0].mxu0 %v911
        %v950 = vpop.f32.mrb[0].mxu0
        %v951 = vadd.f32 0.0, %v950
        %v952 = vpop.f32.mrb[0].mxu0
        %v953 = vpop.f32.mrb[0].mxu0
        %v954 = vpop.f32.mrb[0].mxu0
        %955 = vdwg.mxu0
        %956 = vrot.lane.b32.xlu0 %v737, 112
        %v957 = vpop.permute.xlu0 %956
        %958 = vrot.lane.b32.xlu0 %v737, 48
        %v959 = vpop.permute.xlu0 %958
        %v961 = vsel %vm740, %v957, 0
        %v964 = vsel %vm740, %v959, 0
        %966 = vmatprep.subr.bf16.mxu0 0
        %967 = vmatpush1.bf16.xpose.msra.mxu0 %v964
        %968 = vmatprep.subr.bf16.mxu0 0
        %969 = vmatpush1.bf16.xpose.msra.mxu0 0
        %970 = vmatprep.subr.bf16.mxu0 0
        %971 = vmatpush1.bf16.xpose.msra.mxu0 0
        %972 = vmatprep.subr.bf16.mxu0 0
        %973 = vmatpush1.bf16.xpose.msra.mxu0 0
        %974 = vmatprep.subr.bf16.mxu0 0
        %975 = vmatpush1.bf16.xpose.msra.mxu0 0
        %976 = vmatprep.subr.bf16.mxu0 0
        %977 = vmatpush1.bf16.xpose.msra.mxu0 0
        %978 = vmatprep.subr.bf16.mxu0 0
        %979 = vmatpush1.bf16.xpose.msra.mxu0 0
        %980 = vmatprep.subr.bf16.mxu0 0
        %981 = vmatpush1.bf16.xpose.msra.mxu0 0
        %982 = vmatprep.subr.bf16.mxu0 0
        %983 = vmatpush1.bf16.xpose.msra.mxu0 0
        %984 = vmatprep.subr.bf16.mxu0 0
        %985 = vmatpush1.bf16.xpose.msra.mxu0 0
        %986 = vmatprep.subr.bf16.mxu0 0
        %987 = vmatpush1.bf16.xpose.msra.mxu0 0
        %988 = vmatprep.subr.bf16.mxu0 0
        %989 = vmatpush1.bf16.xpose.msra.mxu0 0
        %990 = vmatprep.subr.bf16.mxu0 0
        %991 = vmatpush1.bf16.xpose.msra.mxu0 0
        %992 = vmatprep.subr.bf16.mxu0 0
        %993 = vmatpush1.bf16.xpose.msra.mxu0 0
        %994 = vmatprep.subr.bf16.mxu0 0
        %995 = vmatpush1.bf16.xpose.msra.mxu0 0
        %996 = vmatprep.subr.bf16.mxu0 0
        %997 = vmatpush1.bf16.xpose.msra.mxu0 0
        %998 = vmatprep.mubr.bf16.mxu0 0
        %999 = vmatmul.mubr.bf16.gmra.mrb[0].mxu0 %v961
        %v1000 = vpop.f32.mrb[0].mxu0
        %v1001 = vadd.f32 0.0, %v1000
        %v1002 = vpop.f32.mrb[0].mxu0
        %v1003 = vpop.f32.mrb[0].mxu0
        %v1004 = vpop.f32.mrb[0].mxu0
        %1005 = vdwg.mxu0
        %1006 = vrot.lane.b32.xlu0 %v787, 112
        %v1007 = vpop.permute.xlu0 %1006
        %1008 = vrot.lane.b32.xlu0 %v787, 48
        %v1009 = vpop.permute.xlu0 %1008
        %v1011 = vsel %vm740, %v1007, 0
        %v1014 = vsel %vm740, %v1009, 0
        %1016 = vmatprep.subr.bf16.mxu0 0
        %1017 = vmatpush1.bf16.xpose.msra.mxu0 %v1014
        %1018 = vmatprep.subr.bf16.mxu0 0
        %1019 = vmatpush1.bf16.xpose.msra.mxu0 0
        %1020 = vmatprep.subr.bf16.mxu0 0
        %1021 = vmatpush1.bf16.xpose.msra.mxu0 0
        %1022 = vmatprep.subr.bf16.mxu0 0
        %1023 = vmatpush1.bf16.xpose.msra.mxu0 0
        %1024 = vmatprep.subr.bf16.mxu0 0
        %1025 = vmatpush1.bf16.xpose.msra.mxu0 0
        %1026 = vmatprep.subr.bf16.mxu0 0
        %1027 = vmatpush1.bf16.xpose.msra.mxu0 0
        %1028 = vmatprep.subr.bf16.mxu0 0
        %1029 = vmatpush1.bf16.xpose.msra.mxu0 0
        %1030 = vmatprep.subr.bf16.mxu0 0
        %1031 = vmatpush1.bf16.xpose.msra.mxu0 0
        %1032 = vmatprep.subr.bf16.mxu0 0
        %1033 = vmatpush1.bf16.xpose.msra.mxu0 0
        %1034 = vmatprep.subr.bf16.mxu0 0
        %1035 = vmatpush1.bf16.xpose.msra.mxu0 0
        %1036 = vmatprep.subr.bf16.mxu0 0
        %1037 = vmatpush1.bf16.xpose.msra.mxu0 0
        %1038 = vmatprep.subr.bf16.mxu0 0
        %1039 = vmatpush1.bf16.xpose.msra.mxu0 0
        %1040 = vmatprep.subr.bf16.mxu0 0
        %1041 = vmatpush1.bf16.xpose.msra.mxu0 0
        %1042 = vmatprep.subr.bf16.mxu0 0
        %1043 = vmatpush1.bf16.xpose.msra.mxu0 0
        %1044 = vmatprep.subr.bf16.mxu0 0
        %1045 = vmatpush1.bf16.xpose.msra.mxu0 0
        %1046 = vmatprep.subr.bf16.mxu0 0
        %1047 = vmatpush1.bf16.xpose.msra.mxu0 0
        %1048 = vmatprep.mubr.bf16.mxu0 0
        %1049 = vmatmul.mubr.bf16.gmra.mrb[0].mxu0 %v1011
        %v1050 = vpop.f32.mrb[0].mxu0
        %v1051 = vadd.f32 0.0, %v1050
        %v1052 = vpop.f32.mrb[0].mxu0
        %v1053 = vpop.f32.mrb[0].mxu0
        %v1054 = vpop.f32.mrb[0].mxu0
        %1055 = vdwg.mxu0
        %v1056 = vsel %vm836, %v1001, -inf
        %1057 = vmax.xlane.f32.xlu0 %v1056
        %v1058 = vpop.xlane.xlu0 %1057
        %v1059 = vsel %vm836, %v1051, -inf
        %1060 = vmax.xlane.f32.xlu0 %v1059
        %v1061 = vpop.xlane.xlu0 %1060
        %v1062 = vsub.f32 %v1001, %v1058
        %v1063 = vsub.f32 %v1051, %v1061
        %v1064 = vmul.f32 %v1062, 1.442695
        %v1065 = vpow.pop %v1064
        %v1066 = vmul.f32 %v1063, 1.442695
        %v1067 = vpow.pop %v1066
        %v1068 = vsel %vm836, %v1065, 0.0
        %1069 = vadd.xlane.f32.xlu0 %v1068
        %v1070 = vpop.xlane.xlu0 %1069
        %v1071 = vsel %vm836, %v1067, 0.0
        %1072 = vadd.xlane.f32.xlu0 %v1071
        %v1073 = vpop.xlane.xlu0 %1072
        %v1074 = vrcp.pop %v1070
        %v1075 = vrcp.pop %v1073
        %v1076 = vmul.f32 %v1065, %v1074
        %v1077 = vmul.f32 %v1067, %v1075
        %v1078 = vpack.c.bf16 %v1076, %v1076
        %v1079 = vpack.c.bf16 %v1077, %v1077
        %1080 = vrot.lane.b32.xlu0 %v735, 112
        %v1081 = vpop.permute.xlu0 %1080
        %v1082 = vrot.slane %v1081, 4
        %v1084 = vsel %vm836, %v1078, 0
        %v1087 = vsel %vm865, %v1082, 0
        %1089 = vmatprep.subr.bf16.mxu0 0
        %1090 = vmatpush1.bf16.msra.mxu0 %v1087
        %1091 = vmatprep.subr.bf16.mxu0 0
        %1092 = vmatpush1.bf16.msra.mxu0 0
        %1093 = vmatprep.subr.bf16.mxu0 0
        %1094 = vmatpush1.bf16.msra.mxu0 0
        %1095 = vmatprep.subr.bf16.mxu0 0
        %1096 = vmatpush1.bf16.msra.mxu0 0
        %1097 = vmatprep.subr.bf16.mxu0 0
        %1098 = vmatpush1.bf16.msra.mxu0 0
        %1099 = vmatprep.subr.bf16.mxu0 0
        %1100 = vmatpush1.bf16.msra.mxu0 0
        %1101 = vmatprep.subr.bf16.mxu0 0
        %1102 = vmatpush1.bf16.msra.mxu0 0
        %1103 = vmatprep.subr.bf16.mxu0 0
        %1104 = vmatpush1.bf16.msra.mxu0 0
        %1105 = vmatprep.subr.bf16.mxu0 0
        %1106 = vmatpush1.bf16.msra.mxu0 0
        %1107 = vmatprep.subr.bf16.mxu0 0
        %1108 = vmatpush1.bf16.msra.mxu0 0
        %1109 = vmatprep.subr.bf16.mxu0 0
        %1110 = vmatpush1.bf16.msra.mxu0 0
        %1111 = vmatprep.subr.bf16.mxu0 0
        %1112 = vmatpush1.bf16.msra.mxu0 0
        %1113 = vmatprep.subr.bf16.mxu0 0
        %1114 = vmatpush1.bf16.msra.mxu0 0
        %1115 = vmatprep.subr.bf16.mxu0 0
        %1116 = vmatpush1.bf16.msra.mxu0 0
        %1117 = vmatprep.subr.bf16.mxu0 0
        %1118 = vmatpush1.bf16.msra.mxu0 0
        %1119 = vmatprep.subr.bf16.mxu0 0
        %1120 = vmatpush1.bf16.msra.mxu0 0
        %1121 = vmatprep.mubr.bf16.mxu0 0
        %1122 = vmatmul.mubr.bf16.gmra.mrb[0].mxu0 %v1084
        %v1123 = vpop.f32.mrb[0].mxu0
        %v1124 = vadd.f32 0.0, %v1123
        %v1125 = vpop.f32.mrb[0].mxu0
        %v1126 = vpop.f32.mrb[0].mxu0
        %v1127 = vpop.f32.mrb[0].mxu0
        %1128 = vdwg.mxu0
        %1129 = vrot.lane.b32.xlu0 %v736, 112
        %v1130 = vpop.permute.xlu0 %1129
        %v1131 = vrot.slane %v1130, 4
        %v1133 = vsel %vm836, %v1079, 0
        %v1136 = vsel %vm865, %v1131, 0
        %1138 = vmatprep.subr.bf16.mxu0 0
        %1139 = vmatpush1.bf16.msra.mxu0 %v1136
        %1140 = vmatprep.subr.bf16.mxu0 0
        %1141 = vmatpush1.bf16.msra.mxu0 0
        %1142 = vmatprep.subr.bf16.mxu0 0
        %1143 = vmatpush1.bf16.msra.mxu0 0
        %1144 = vmatprep.subr.bf16.mxu0 0
        %1145 = vmatpush1.bf16.msra.mxu0 0
        %1146 = vmatprep.subr.bf16.mxu0 0
        %1147 = vmatpush1.bf16.msra.mxu0 0
        %1148 = vmatprep.subr.bf16.mxu0 0
        %1149 = vmatpush1.bf16.msra.mxu0 0
        %1150 = vmatprep.subr.bf16.mxu0 0
        %1151 = vmatpush1.bf16.msra.mxu0 0
        %1152 = vmatprep.subr.bf16.mxu0 0
        %1153 = vmatpush1.bf16.msra.mxu0 0
        %1154 = vmatprep.subr.bf16.mxu0 0
        %1155 = vmatpush1.bf16.msra.mxu0 0
        %1156 = vmatprep.subr.bf16.mxu0 0
        %1157 = vmatpush1.bf16.msra.mxu0 0
        %1158 = vmatprep.subr.bf16.mxu0 0
        %1159 = vmatpush1.bf16.msra.mxu0 0
        %1160 = vmatprep.subr.bf16.mxu0 0
        %1161 = vmatpush1.bf16.msra.mxu0 0
        %1162 = vmatprep.subr.bf16.mxu0 0
        %1163 = vmatpush1.bf16.msra.mxu0 0
        %1164 = vmatprep.subr.bf16.mxu0 0
        %1165 = vmatpush1.bf16.msra.mxu0 0
        %1166 = vmatprep.subr.bf16.mxu0 0
        %1167 = vmatpush1.bf16.msra.mxu0 0
        %1168 = vmatprep.subr.bf16.mxu0 0
        %1169 = vmatpush1.bf16.msra.mxu0 0
        %1170 = vmatprep.mubr.bf16.mxu0 0
        %1171 = vmatmul.mubr.bf16.gmra.mrb[0].mxu0 %v1133
        %v1172 = vpop.f32.mrb[0].mxu0
        %v1173 = vadd.f32 0.0, %v1172
        %v1174 = vpop.f32.mrb[0].mxu0
        %v1175 = vpop.f32.mrb[0].mxu0
        %v1176 = vpop.f32.mrb[0].mxu0
        %1177 = vdwg.mxu0
        %1178 = vrot.lane.b32.xlu0 %v737, 96
        %v1179 = vpop.permute.xlu0 %1178
        %1180 = vrot.lane.b32.xlu0 %v737, 32
        %v1181 = vpop.permute.xlu0 %1180
        %v1183 = vsel %vm740, %v1179, 0
        %v1186 = vsel %vm740, %v1181, 0
        %1188 = vmatprep.subr.bf16.mxu0 0
        %1189 = vmatpush1.bf16.xpose.msra.mxu0 %v1186
        %1190 = vmatprep.subr.bf16.mxu0 0
        %1191 = vmatpush1.bf16.xpose.msra.mxu0 0
        %1192 = vmatprep.subr.bf16.mxu0 0
        %1193 = vmatpush1.bf16.xpose.msra.mxu0 0
        %1194 = vmatprep.subr.bf16.mxu0 0
        %1195 = vmatpush1.bf16.xpose.msra.mxu0 0
        %1196 = vmatprep.subr.bf16.mxu0 0
        %1197 = vmatpush1.bf16.xpose.msra.mxu0 0
        %1198 = vmatprep.subr.bf16.mxu0 0
        %1199 = vmatpush1.bf16.xpose.msra.mxu0 0
        %1200 = vmatprep.subr.bf16.mxu0 0
        %1201 = vmatpush1.bf16.xpose.msra.mxu0 0
        %1202 = vmatprep.subr.bf16.mxu0 0
        %1203 = vmatpush1.bf16.xpose.msra.mxu0 0
        %1204 = vmatprep.subr.bf16.mxu0 0
        %1205 = vmatpush1.bf16.xpose.msra.mxu0 0
        %1206 = vmatprep.subr.bf16.mxu0 0
        %1207 = vmatpush1.bf16.xpose.msra.mxu0 0
        %1208 = vmatprep.subr.bf16.mxu0 0
        %1209 = vmatpush1.bf16.xpose.msra.mxu0 0
        %1210 = vmatprep.subr.bf16.mxu0 0
        %1211 = vmatpush1.bf16.xpose.msra.mxu0 0
        %1212 = vmatprep.subr.bf16.mxu0 0
        %1213 = vmatpush1.bf16.xpose.msra.mxu0 0
        %1214 = vmatprep.subr.bf16.mxu0 0
        %1215 = vmatpush1.bf16.xpose.msra.mxu0 0
        %1216 = vmatprep.subr.bf16.mxu0 0
        %1217 = vmatpush1.bf16.xpose.msra.mxu0 0
        %1218 = vmatprep.subr.bf16.mxu0 0
        %1219 = vmatpush1.bf16.xpose.msra.mxu0 0
        %1220 = vmatprep.mubr.bf16.mxu0 0
        %1221 = vmatmul.mubr.bf16.gmra.mrb[0].mxu0 %v1183
        %v1222 = vpop.f32.mrb[0].mxu0
        %v1223 = vadd.f32 0.0, %v1222
        %v1224 = vpop.f32.mrb[0].mxu0
        %v1225 = vpop.f32.mrb[0].mxu0
        %v1226 = vpop.f32.mrb[0].mxu0
        %1227 = vdwg.mxu0
        %1228 = vrot.lane.b32.xlu0 %v787, 96
        %v1229 = vpop.permute.xlu0 %1228
        %1230 = vrot.lane.b32.xlu0 %v787, 32
        %v1231 = vpop.permute.xlu0 %1230
        %v1233 = vsel %vm740, %v1229, 0
        %v1236 = vsel %vm740, %v1231, 0
        %1238 = vmatprep.subr.bf16.mxu0 0
        %1239 = vmatpush1.bf16.xpose.msra.mxu0 %v1236
        %1240 = vmatprep.subr.bf16.mxu0 0
        %1241 = vmatpush1.bf16.xpose.msra.mxu0 0
        %1242 = vmatprep.subr.bf16.mxu0 0
        %1243 = vmatpush1.bf16.xpose.msra.mxu0 0
        %1244 = vmatprep.subr.bf16.mxu0 0
        %1245 = vmatpush1.bf16.xpose.msra.mxu0 0
        %1246 = vmatprep.subr.bf16.mxu0 0
        %1247 = vmatpush1.bf16.xpose.msra.mxu0 0
        %1248 = vmatprep.subr.bf16.mxu0 0
        %1249 = vmatpush1.bf16.xpose.msra.mxu0 0
        %1250 = vmatprep.subr.bf16.mxu0 0
        %1251 = vmatpush1.bf16.xpose.msra.mxu0 0
        %1252 = vmatprep.subr.bf16.mxu0 0
        %1253 = vmatpush1.bf16.xpose.msra.mxu0 0
        %1254 = vmatprep.subr.bf16.mxu0 0
        %1255 = vmatpush1.bf16.xpose.msra.mxu0 0
        %1256 = vmatprep.subr.bf16.mxu0 0
        %1257 = vmatpush1.bf16.xpose.msra.mxu0 0
        %1258 = vmatprep.subr.bf16.mxu0 0
        %1259 = vmatpush1.bf16.xpose.msra.mxu0 0
        %1260 = vmatprep.subr.bf16.mxu0 0
        %1261 = vmatpush1.bf16.xpose.msra.mxu0 0
        %1262 = vmatprep.subr.bf16.mxu0 0
        %1263 = vmatpush1.bf16.xpose.msra.mxu0 0
        %1264 = vmatprep.subr.bf16.mxu0 0
        %1265 = vmatpush1.bf16.xpose.msra.mxu0 0
        %1266 = vmatprep.subr.bf16.mxu0 0
        %1267 = vmatpush1.bf16.xpose.msra.mxu0 0
        %1268 = vmatprep.subr.bf16.mxu0 0
        %1269 = vmatpush1.bf16.xpose.msra.mxu0 0
        %1270 = vmatprep.mubr.bf16.mxu0 0
        %1271 = vmatmul.mubr.bf16.gmra.mrb[0].mxu0 %v1233
        %v1272 = vpop.f32.mrb[0].mxu0
        %v1273 = vadd.f32 0.0, %v1272
        %v1274 = vpop.f32.mrb[0].mxu0
        %v1275 = vpop.f32.mrb[0].mxu0
        %v1276 = vpop.f32.mrb[0].mxu0
        %1277 = vdwg.mxu0
        %v1278 = vsel %vm836, %v1223, -inf
        %1279 = vmax.xlane.f32.xlu0 %v1278
        %v1280 = vpop.xlane.xlu0 %1279
        %v1281 = vsel %vm836, %v1273, -inf
        %1282 = vmax.xlane.f32.xlu0 %v1281
        %v1283 = vpop.xlane.xlu0 %1282
        %v1284 = vsub.f32 %v1223, %v1280
        %v1285 = vsub.f32 %v1273, %v1283
        %v1286 = vmul.f32 %v1284, 1.442695
        %v1287 = vpow.pop %v1286
        %v1288 = vmul.f32 %v1285, 1.442695
        %v1289 = vpow.pop %v1288
        %v1290 = vsel %vm836, %v1287, 0.0
        %1291 = vadd.xlane.f32.xlu0 %v1290
        %v1292 = vpop.xlane.xlu0 %1291
        %v1293 = vsel %vm836, %v1289, 0.0
        %1294 = vadd.xlane.f32.xlu0 %v1293
        %v1295 = vpop.xlane.xlu0 %1294
        %v1296 = vrcp.pop %v1292
        %v1297 = vrcp.pop %v1295
        %v1298 = vmul.f32 %v1287, %v1296
        %v1299 = vmul.f32 %v1289, %v1297
        %v1300 = vpack.c.bf16 %v1298, %v1298
        %v1301 = vpack.c.bf16 %v1299, %v1299
        %1302 = vrot.lane.b32.xlu0 %v735, 96
        %v1303 = vpop.permute.xlu0 %1302
        %v1304 = vrot.slane %v1303, 4
        %v1306 = vsel %vm836, %v1300, 0
        %v1309 = vsel %vm865, %v1304, 0
        %1311 = vmatprep.subr.bf16.mxu0 0
        %1312 = vmatpush1.bf16.msra.mxu0 %v1309
        %1313 = vmatprep.subr.bf16.mxu0 0
        %1314 = vmatpush1.bf16.msra.mxu0 0
        %1315 = vmatprep.subr.bf16.mxu0 0
        %1316 = vmatpush1.bf16.msra.mxu0 0
        %1317 = vmatprep.subr.bf16.mxu0 0
        %1318 = vmatpush1.bf16.msra.mxu0 0
        %1319 = vmatprep.subr.bf16.mxu0 0
        %1320 = vmatpush1.bf16.msra.mxu0 0
        %1321 = vmatprep.subr.bf16.mxu0 0
        %1322 = vmatpush1.bf16.msra.mxu0 0
        %1323 = vmatprep.subr.bf16.mxu0 0
        %1324 = vmatpush1.bf16.msra.mxu0 0
        %1325 = vmatprep.subr.bf16.mxu0 0
        %1326 = vmatpush1.bf16.msra.mxu0 0
        %1327 = vmatprep.subr.bf16.mxu0 0
        %1328 = vmatpush1.bf16.msra.mxu0 0
        %1329 = vmatprep.subr.bf16.mxu0 0
        %1330 = vmatpush1.bf16.msra.mxu0 0
        %1331 = vmatprep.subr.bf16.mxu0 0
        %1332 = vmatpush1.bf16.msra.mxu0 0
        %1333 = vmatprep.subr.bf16.mxu0 0
        %1334 = vmatpush1.bf16.msra.mxu0 0
        %1335 = vmatprep.subr.bf16.mxu0 0
        %1336 = vmatpush1.bf16.msra.mxu0 0
        %1337 = vmatprep.subr.bf16.mxu0 0
        %1338 = vmatpush1.bf16.msra.mxu0 0
        %1339 = vmatprep.subr.bf16.mxu0 0
        %1340 = vmatpush1.bf16.msra.mxu0 0
        %1341 = vmatprep.subr.bf16.mxu0 0
        %1342 = vmatpush1.bf16.msra.mxu0 0
        %1343 = vmatprep.mubr.bf16.mxu0 0
        %1344 = vmatmul.mubr.bf16.gmra.mrb[0].mxu0 %v1306
        %v1345 = vpop.f32.mrb[0].mxu0
        %v1346 = vadd.f32 0.0, %v1345
        %v1347 = vpop.f32.mrb[0].mxu0
        %v1348 = vpop.f32.mrb[0].mxu0
        %v1349 = vpop.f32.mrb[0].mxu0
        %1350 = vdwg.mxu0
        %1351 = vrot.lane.b32.xlu0 %v736, 96
        %v1352 = vpop.permute.xlu0 %1351
        %v1353 = vrot.slane %v1352, 4
        %v1355 = vsel %vm836, %v1301, 0
        %v1358 = vsel %vm865, %v1353, 0
        %1360 = vmatprep.subr.bf16.mxu0 0
        %1361 = vmatpush1.bf16.msra.mxu0 %v1358
        %1362 = vmatprep.subr.bf16.mxu0 0
        %1363 = vmatpush1.bf16.msra.mxu0 0
        %1364 = vmatprep.subr.bf16.mxu0 0
        %1365 = vmatpush1.bf16.msra.mxu0 0
        %1366 = vmatprep.subr.bf16.mxu0 0
        %1367 = vmatpush1.bf16.msra.mxu0 0
        %1368 = vmatprep.subr.bf16.mxu0 0
        %1369 = vmatpush1.bf16.msra.mxu0 0
        %1370 = vmatprep.subr.bf16.mxu0 0
        %1371 = vmatpush1.bf16.msra.mxu0 0
        %1372 = vmatprep.subr.bf16.mxu0 0
        %1373 = vmatpush1.bf16.msra.mxu0 0
        %1374 = vmatprep.subr.bf16.mxu0 0
        %1375 = vmatpush1.bf16.msra.mxu0 0
        %1376 = vmatprep.subr.bf16.mxu0 0
        %1377 = vmatpush1.bf16.msra.mxu0 0
        %1378 = vmatprep.subr.bf16.mxu0 0
        %1379 = vmatpush1.bf16.msra.mxu0 0
        %1380 = vmatprep.subr.bf16.mxu0 0
        %1381 = vmatpush1.bf16.msra.mxu0 0
        %1382 = vmatprep.subr.bf16.mxu0 0
        %1383 = vmatpush1.bf16.msra.mxu0 0
        %1384 = vmatprep.subr.bf16.mxu0 0
        %1385 = vmatpush1.bf16.msra.mxu0 0
        %1386 = vmatprep.subr.bf16.mxu0 0
        %1387 = vmatpush1.bf16.msra.mxu0 0
        %1388 = vmatprep.subr.bf16.mxu0 0
        %1389 = vmatpush1.bf16.msra.mxu0 0
        %1390 = vmatprep.subr.bf16.mxu0 0
        %1391 = vmatpush1.bf16.msra.mxu0 0
        %1392 = vmatprep.mubr.bf16.mxu0 0
        %1393 = vmatmul.mubr.bf16.gmra.mrb[0].mxu0 %v1355
        %v1394 = vpop.f32.mrb[0].mxu0
        %v1395 = vadd.f32 0.0, %v1394
        %v1396 = vpop.f32.mrb[0].mxu0
        %v1397 = vpop.f32.mrb[0].mxu0
        %v1398 = vpop.f32.mrb[0].mxu0
        %1399 = vdwg.mxu0
        %1400 = vrot.lane.b32.xlu0 %v737, 80
        %v1401 = vpop.permute.xlu0 %1400
        %1402 = vrot.lane.b32.xlu0 %v737, 16
        %v1403 = vpop.permute.xlu0 %1402
        %v1405 = vsel %vm740, %v1401, 0
        %v1408 = vsel %vm740, %v1403, 0
        %1410 = vmatprep.subr.bf16.mxu0 0
        %1411 = vmatpush1.bf16.xpose.msra.mxu0 %v1408
        %1412 = vmatprep.subr.bf16.mxu0 0
        %1413 = vmatpush1.bf16.xpose.msra.mxu0 0
        %1414 = vmatprep.subr.bf16.mxu0 0
        %1415 = vmatpush1.bf16.xpose.msra.mxu0 0
        %1416 = vmatprep.subr.bf16.mxu0 0
        %1417 = vmatpush1.bf16.xpose.msra.mxu0 0
        %1418 = vmatprep.subr.bf16.mxu0 0
        %1419 = vmatpush1.bf16.xpose.msra.mxu0 0
        %1420 = vmatprep.subr.bf16.mxu0 0
        %1421 = vmatpush1.bf16.xpose.msra.mxu0 0
        %1422 = vmatprep.subr.bf16.mxu0 0
        %1423 = vmatpush1.bf16.xpose.msra.mxu0 0
        %1424 = vmatprep.subr.bf16.mxu0 0
        %1425 = vmatpush1.bf16.xpose.msra.mxu0 0
        %1426 = vmatprep.subr.bf16.mxu0 0
        %1427 = vmatpush1.bf16.xpose.msra.mxu0 0
        %1428 = vmatprep.subr.bf16.mxu0 0
        %1429 = vmatpush1.bf16.xpose.msra.mxu0 0
        %1430 = vmatprep.subr.bf16.mxu0 0
        %1431 = vmatpush1.bf16.xpose.msra.mxu0 0
        %1432 = vmatprep.subr.bf16.mxu0 0
        %1433 = vmatpush1.bf16.xpose.msra.mxu0 0
        %1434 = vmatprep.subr.bf16.mxu0 0
        %1435 = vmatpush1.bf16.xpose.msra.mxu0 0
        %1436 = vmatprep.subr.bf16.mxu0 0
        %1437 = vmatpush1.bf16.xpose.msra.mxu0 0
        %1438 = vmatprep.subr.bf16.mxu0 0
        %1439 = vmatpush1.bf16.xpose.msra.mxu0 0
        %1440 = vmatprep.subr.bf16.mxu0 0
        %1441 = vmatpush1.bf16.xpose.msra.mxu0 0
        %1442 = vmatprep.mubr.bf16.mxu0 0
        %1443 = vmatmul.mubr.bf16.gmra.mrb[0].mxu0 %v1405
        %v1444 = vpop.f32.mrb[0].mxu0
        %v1445 = vadd.f32 0.0, %v1444
        %v1446 = vpop.f32.mrb[0].mxu0
        %v1447 = vpop.f32.mrb[0].mxu0
        %v1448 = vpop.f32.mrb[0].mxu0
        %1449 = vdwg.mxu0
        %1450 = vrot.lane.b32.xlu0 %v787, 80
        %v1451 = vpop.permute.xlu0 %1450
        %1452 = vrot.lane.b32.xlu0 %v787, 16
        %v1453 = vpop.permute.xlu0 %1452
        %v1455 = vsel %vm740, %v1451, 0
        %v1458 = vsel %vm740, %v1453, 0
        %1460 = vmatprep.subr.bf16.mxu0 0
        %1461 = vmatpush1.bf16.xpose.msra.mxu0 %v1458
        %1462 = vmatprep.subr.bf16.mxu0 0
        %1463 = vmatpush1.bf16.xpose.msra.mxu0 0
        %1464 = vmatprep.subr.bf16.mxu0 0
        %1465 = vmatpush1.bf16.xpose.msra.mxu0 0
        %1466 = vmatprep.subr.bf16.mxu0 0
        %1467 = vmatpush1.bf16.xpose.msra.mxu0 0
        %1468 = vmatprep.subr.bf16.mxu0 0
        %1469 = vmatpush1.bf16.xpose.msra.mxu0 0
        %1470 = vmatprep.subr.bf16.mxu0 0
        %1471 = vmatpush1.bf16.xpose.msra.mxu0 0
        %1472 = vmatprep.subr.bf16.mxu0 0
        %1473 = vmatpush1.bf16.xpose.msra.mxu0 0
        %1474 = vmatprep.subr.bf16.mxu0 0
        %1475 = vmatpush1.bf16.xpose.msra.mxu0 0
        %1476 = vmatprep.subr.bf16.mxu0 0
        %1477 = vmatpush1.bf16.xpose.msra.mxu0 0
        %1478 = vmatprep.subr.bf16.mxu0 0
        %1479 = vmatpush1.bf16.xpose.msra.mxu0 0
        %1480 = vmatprep.subr.bf16.mxu0 0
        %1481 = vmatpush1.bf16.xpose.msra.mxu0 0
        %1482 = vmatprep.subr.bf16.mxu0 0
        %1483 = vmatpush1.bf16.xpose.msra.mxu0 0
        %1484 = vmatprep.subr.bf16.mxu0 0
        %1485 = vmatpush1.bf16.xpose.msra.mxu0 0
        %1486 = vmatprep.subr.bf16.mxu0 0
        %1487 = vmatpush1.bf16.xpose.msra.mxu0 0
        %1488 = vmatprep.subr.bf16.mxu0 0
        %1489 = vmatpush1.bf16.xpose.msra.mxu0 0
        %1490 = vmatprep.subr.bf16.mxu0 0
        %1491 = vmatpush1.bf16.xpose.msra.mxu0 0
        %1492 = vmatprep.mubr.bf16.mxu0 0
        %1493 = vmatmul.mubr.bf16.gmra.mrb[0].mxu0 %v1455
        %v1494 = vpop.f32.mrb[0].mxu0
        %v1495 = vadd.f32 0.0, %v1494
        %v1496 = vpop.f32.mrb[0].mxu0
        %v1497 = vpop.f32.mrb[0].mxu0
        %v1498 = vpop.f32.mrb[0].mxu0
        %1499 = vdwg.mxu0
        %v1500 = vsel %vm836, %v1445, -inf
        %1501 = vmax.xlane.f32.xlu0 %v1500
        %v1502 = vpop.xlane.xlu0 %1501
        %v1503 = vsel %vm836, %v1495, -inf
        %1504 = vmax.xlane.f32.xlu0 %v1503
        %v1505 = vpop.xlane.xlu0 %1504
        %v1506 = vsub.f32 %v1445, %v1502
        %v1507 = vsub.f32 %v1495, %v1505
        %v1508 = vmul.f32 %v1506, 1.442695
        %v1509 = vpow.pop %v1508
        %v1510 = vmul.f32 %v1507, 1.442695
        %v1511 = vpow.pop %v1510
        %v1512 = vsel %vm836, %v1509, 0.0
        %1513 = vadd.xlane.f32.xlu0 %v1512
        %v1514 = vpop.xlane.xlu0 %1513
        %v1515 = vsel %vm836, %v1511, 0.0
        %1516 = vadd.xlane.f32.xlu0 %v1515
        %v1517 = vpop.xlane.xlu0 %1516
        %v1518 = vrcp.pop %v1514
        %v1519 = vrcp.pop %v1517
        %v1520 = vmul.f32 %v1509, %v1518
        %v1521 = vmul.f32 %v1511, %v1519
        %v1522 = vpack.c.bf16 %v1520, %v1520
        %v1523 = vpack.c.bf16 %v1521, %v1521
        %1524 = vrot.lane.b32.xlu0 %v735, 80
        %v1525 = vpop.permute.xlu0 %1524
        %v1526 = vrot.slane %v1525, 4
        %v1528 = vsel %vm836, %v1522, 0
        %v1531 = vsel %vm865, %v1526, 0
        %1533 = vmatprep.subr.bf16.mxu0 0
        %1534 = vmatpush1.bf16.msra.mxu0 %v1531
        %1535 = vmatprep.subr.bf16.mxu0 0
        %1536 = vmatpush1.bf16.msra.mxu0 0
        %1537 = vmatprep.subr.bf16.mxu0 0
        %1538 = vmatpush1.bf16.msra.mxu0 0
        %1539 = vmatprep.subr.bf16.mxu0 0
        %1540 = vmatpush1.bf16.msra.mxu0 0
        %1541 = vmatprep.subr.bf16.mxu0 0
        %1542 = vmatpush1.bf16.msra.mxu0 0
        %1543 = vmatprep.subr.bf16.mxu0 0
        %1544 = vmatpush1.bf16.msra.mxu0 0
        %1545 = vmatprep.subr.bf16.mxu0 0
        %1546 = vmatpush1.bf16.msra.mxu0 0
        %1547 = vmatprep.subr.bf16.mxu0 0
        %1548 = vmatpush1.bf16.msra.mxu0 0
        %1549 = vmatprep.subr.bf16.mxu0 0
        %1550 = vmatpush1.bf16.msra.mxu0 0
        %1551 = vmatprep.subr.bf16.mxu0 0
        %1552 = vmatpush1.bf16.msra.mxu0 0
        %1553 = vmatprep.subr.bf16.mxu0 0
        %1554 = vmatpush1.bf16.msra.mxu0 0
        %1555 = vmatprep.subr.bf16.mxu0 0
        %1556 = vmatpush1.bf16.msra.mxu0 0
        %1557 = vmatprep.subr.bf16.mxu0 0
        %1558 = vmatpush1.bf16.msra.mxu0 0
        %1559 = vmatprep.subr.bf16.mxu0 0
        %1560 = vmatpush1.bf16.msra.mxu0 0
        %1561 = vmatprep.subr.bf16.mxu0 0
        %1562 = vmatpush1.bf16.msra.mxu0 0
        %1563 = vmatprep.subr.bf16.mxu0 0
        %1564 = vmatpush1.bf16.msra.mxu0 0
        %1565 = vmatprep.mubr.bf16.mxu0 0
        %1566 = vmatmul.mubr.bf16.gmra.mrb[0].mxu0 %v1528
        %v1567 = vpop.f32.mrb[0].mxu0
        %v1568 = vadd.f32 0.0, %v1567
        %v1569 = vpop.f32.mrb[0].mxu0
        %v1570 = vpop.f32.mrb[0].mxu0
        %v1571 = vpop.f32.mrb[0].mxu0
        %1572 = vdwg.mxu0
        %1573 = vrot.lane.b32.xlu0 %v736, 80
        %v1574 = vpop.permute.xlu0 %1573
        %v1575 = vrot.slane %v1574, 4
        %v1577 = vsel %vm836, %v1523, 0
        %v1580 = vsel %vm865, %v1575, 0
        %1582 = vmatprep.subr.bf16.mxu0 0
        %1583 = vmatpush1.bf16.msra.mxu0 %v1580
        %1584 = vmatprep.subr.bf16.mxu0 0
        %1585 = vmatpush1.bf16.msra.mxu0 0
        %1586 = vmatprep.subr.bf16.mxu0 0
        %1587 = vmatpush1.bf16.msra.mxu0 0
        %1588 = vmatprep.subr.bf16.mxu0 0
        %1589 = vmatpush1.bf16.msra.mxu0 0
        %1590 = vmatprep.subr.bf16.mxu0 0
        %1591 = vmatpush1.bf16.msra.mxu0 0
        %1592 = vmatprep.subr.bf16.mxu0 0
        %1593 = vmatpush1.bf16.msra.mxu0 0
        %1594 = vmatprep.subr.bf16.mxu0 0
        %1595 = vmatpush1.bf16.msra.mxu0 0
        %1596 = vmatprep.subr.bf16.mxu0 0
        %1597 = vmatpush1.bf16.msra.mxu0 0
        %1598 = vmatprep.subr.bf16.mxu0 0
        %1599 = vmatpush1.bf16.msra.mxu0 0
        %1600 = vmatprep.subr.bf16.mxu0 0
        %1601 = vmatpush1.bf16.msra.mxu0 0
        %1602 = vmatprep.subr.bf16.mxu0 0
        %1603 = vmatpush1.bf16.msra.mxu0 0
        %1604 = vmatprep.subr.bf16.mxu0 0
        %1605 = vmatpush1.bf16.msra.mxu0 0
        %1606 = vmatprep.subr.bf16.mxu0 0
        %1607 = vmatpush1.bf16.msra.mxu0 0
        %1608 = vmatprep.subr.bf16.mxu0 0
        %1609 = vmatpush1.bf16.msra.mxu0 0
        %1610 = vmatprep.subr.bf16.mxu0 0
        %1611 = vmatpush1.bf16.msra.mxu0 0
        %1612 = vmatprep.subr.bf16.mxu0 0
        %1613 = vmatpush1.bf16.msra.mxu0 0
        %1614 = vmatprep.mubr.bf16.mxu0 0
        %1615 = vmatmul.mubr.bf16.gmra.mrb[0].mxu0 %v1577
        %v1616 = vpop.f32.mrb[0].mxu0
        %v1617 = vadd.f32 0.0, %v1616
        %v1618 = vpop.f32.mrb[0].mxu0
        %v1619 = vpop.f32.mrb[0].mxu0
        %v1620 = vpop.f32.mrb[0].mxu0
        %1621 = vdwg.mxu0
        %1624 = vrot.lane.b32.xlu0 %v1124, 16
        %v1625 = vpop.permute.xlu0 %1624
        %1626 = vrot.lane.b32.xlu0 %v1173, 16
        %v1627 = vpop.permute.xlu0 %1626
        %1632 = vrot.lane.b32.xlu0 %v1346, 32
        %v1633 = vpop.permute.xlu0 %1632
        %1634 = vrot.lane.b32.xlu0 %v1395, 32
        %v1635 = vpop.permute.xlu0 %1634
        %1640 = vrot.lane.b32.xlu0 %v1568, 48
        %v1641 = vpop.permute.xlu0 %1640
        %1642 = vrot.lane.b32.xlu0 %v1617, 48
        %v1643 = vpop.permute.xlu0 %1642
        %v1646 = vsel %vm740, %v904, %v1625
        %v1647 = vsel %vm740, %v951, %v1627
        %v1648 = vsel %vm610, %v1646, %v1633
        %v1649 = vsel %vm610, %v1647, %v1635
        %vm1650 = vcmask 392192
        %v1651 = vsel %vm1650, %v1648, %v1641
        %v1652 = vsel %vm1650, %v1649, %v1643
        %v1653 = vpack.c.bf16 %v1652, %v1651
        %v1654 = vld [vmem:[%s571] sm:$0xf]
        %v1655 = vld [vmem:[%s571 + $0x4] sm:$0xf]
        %v1656 = vld [vmem:[%s571 + $0x8] sm:$0xf]
        %v1657 = vld [vmem:[%s571 + $0xc] sm:$0xf]
        %v1658 = vld [vmem:[%s571 + $0x10] sm:$0xf]
        %v1659 = vld [vmem:[%s571 + $0x14] sm:$0xf]
        %v1660 = vld [vmem:[%s571 + $0x18] sm:$0xf]
        %v1661 = vld [vmem:[%s571 + $0x1c] sm:$0xf]
        %v1670 = vunpack.c.l.b16 %v1654
        %v1671 = vunpack.c.l.b16 %v1655
        %v1672 = vunpack.c.l.b16 %v1656
        %v1673 = vunpack.c.l.b16 %v1657
        %v1674 = vunpack.c.l.b16 %v1658
        %v1675 = vunpack.c.l.b16 %v1659
        %v1676 = vunpack.c.l.b16 %v1660
        %v1677 = vunpack.c.l.b16 %v1661
        %v1678 = vpack.c.b16 %v1671, %v1670
        %v1679 = vpack.c.b16 %v1673, %v1672
        %v1680 = vpack.c.b16 %v1675, %v1674
        %v1681 = vpack.c.b16 %v1677, %v1676
        %vm1686 = vcmask 523264
        %v1688 = vsel %vm1686, %v1653, 0
        %1690 = vmatprep.subr.bf16.mxu0 0
        %1691 = vmatpush1.bf16.msra.mxu0 %v1678
        %1692 = vmatprep.subr.bf16.mxu0 0
        %1693 = vmatpush1.bf16.msra.mxu0 %v1679
        %1694 = vmatprep.subr.bf16.mxu0 0
        %1695 = vmatpush1.bf16.msra.mxu0 %v1680
        %1696 = vmatprep.subr.bf16.mxu0 0
        %1697 = vmatpush1.bf16.msra.mxu0 %v1681
        %1698 = vmatprep.subr.bf16.mxu0 0
        %1699 = vmatpush1.bf16.msra.mxu0 0
        %1700 = vmatprep.subr.bf16.mxu0 0
        %1701 = vmatpush1.bf16.msra.mxu0 0
        %1702 = vmatprep.subr.bf16.mxu0 0
        %1703 = vmatpush1.bf16.msra.mxu0 0
        %1704 = vmatprep.subr.bf16.mxu0 0
        %1705 = vmatpush1.bf16.msra.mxu0 0
        %1706 = vmatprep.subr.bf16.mxu0 0
        %1707 = vmatpush1.bf16.msra.mxu0 0
        %1708 = vmatprep.subr.bf16.mxu0 0
        %1709 = vmatpush1.bf16.msra.mxu0 0
        %1710 = vmatprep.subr.bf16.mxu0 0
        %1711 = vmatpush1.bf16.msra.mxu0 0
        %1712 = vmatprep.subr.bf16.mxu0 0
        %1713 = vmatpush1.bf16.msra.mxu0 0
        %1714 = vmatprep.subr.bf16.mxu0 0
        %1715 = vmatpush1.bf16.msra.mxu0 0
        %1716 = vmatprep.subr.bf16.mxu0 0
        %1717 = vmatpush1.bf16.msra.mxu0 0
        %1718 = vmatprep.subr.bf16.mxu0 0
        %1719 = vmatpush1.bf16.msra.mxu0 0
        %1720 = vmatprep.subr.bf16.mxu0 0
        %1721 = vmatpush1.bf16.msra.mxu0 0
        %1722 = vmatprep.mubr.bf16.mxu0 0
        %1723 = vmatmul.mubr.bf16.gmra.mrb[0].mxu0 %v1688
        %v1724 = vpop.f32.mrb[0].mxu0
        %v1725 = vadd.f32 0.0, %v1724
        %v1726 = vpop.f32.mrb[0].mxu0
        %v1727 = vpop.f32.mrb[0].mxu0
        %v1728 = vadd.f32 0.0, %v1727
        %v1729 = vpop.f32.mrb[0].mxu0
        %1730 = vdwg.mxu0
        %v1731 = vadd.f32 %v608, %v1725
        %v1732 = vadd.f32 %v609, %v1728
        %v1733 = vld [vmem:[%s574] sm:$0x1]
        %v1735 = vlaneseq
        %v1736 = vshrl.u32 %v1735, 7
        %v1737 = vsub.s32 0, %v1736
        %v1738 = vrot.slane %v1733, %v1737
        %v1740 = vadd.f32 %v1731, %v1738
        %v1741 = vadd.f32 %v1732, %v1738
        %v1742 = vsel %vm610, %v1740, 0.0
        %1743 = vadd.xlane.f32.xlu0 %v1742
        %v1744 = vpop.xlane.xlu0 %1743
        %v1745 = vsel %vm610, %v1741, 0.0
        %1746 = vadd.xlane.f32.xlu0 %v1745
        %v1747 = vpop.xlane.xlu0 %1746
        %v1748 = vmul.f32 %v1744, %v617
        %v1749 = vmul.f32 %v1747, %v617
        %v1750 = vsub.f32 %v1740, %v1748
        %v1751 = vsub.f32 %v1741, %v1749
        %v1752 = vmul.f32 %v1750, %v1750
        %v1753 = vmul.f32 %v1751, %v1751
        %v1754 = vsel %vm610, %v1752, 0.0
        %1755 = vadd.xlane.f32.xlu0 %v1754
        %v1756 = vpop.xlane.xlu0 %1755
        %v1757 = vsel %vm610, %v1753, 0.0
        %1758 = vadd.xlane.f32.xlu0 %v1757
        %v1759 = vpop.xlane.xlu0 %1758
        %v1760 = vmul.f32 %v1756, %v617
        %v1761 = vmul.f32 %v1759, %v617
        %v1762 = vadd.f32 %v1760, 1e-05
        %v1763 = vadd.f32 %v1761, 1e-05
        %v1764 = vrsqrt.pop %v1762
        %v1765 = vrsqrt.pop %v1763
        %v1766 = vmul.f32 %v1750, %v1764
        %v1767 = vmul.f32 %v1751, %v1765
        %v1768 = vld [vmem:[%s577] sm:$0x1]
        %v1770 = vlaneseq
        %v1771 = vshrl.u32 %v1770, 7
        %v1772 = vsub.s32 0, %v1771
        %v1773 = vrot.slane %v1768, %v1772
        %v1775 = vmul.f32 %v1766, %v1773
        %v1776 = vmul.f32 %v1767, %v1773
        %v1777 = vld [vmem:[%s580] sm:$0x1]
        %v1779 = vlaneseq
        %v1780 = vshrl.u32 %v1779, 7
        %v1781 = vsub.s32 0, %v1780
        %v1782 = vrot.slane %v1777, %v1781
        %v1784 = vadd.f32 %v1775, %v1782
        %v1785 = vadd.f32 %v1776, %v1782
        %v1786 = vpack.c.bf16 %v1785, %v1784
        %v1787 = vld [vmem:[%s585] sm:$0xf]
        %v1788 = vld [vmem:[%s585 + $0x4] sm:$0xf]
        %v1789 = vld [vmem:[%s585 + $0x8] sm:$0xf]
        %v1790 = vld [vmem:[%s585 + $0xc] sm:$0xf]
        %v1791 = vld [vmem:[%s588] sm:$0x1]
        %v1793 = vlaneseq
        %v1794 = vshrl.u32 %v1793, 7
        %v1795 = vsub.s32 0, %v1794
        %v1796 = vrot.slane %v1791, %v1795
        %v1802 = vunpack.c.l.b16 %v1787
        %v1803 = vunpack.c.l.b16 %v1788
        %v1804 = vunpack.c.l.b16 %v1789
        %v1805 = vunpack.c.l.b16 %v1790
        %v1806 = vpack.c.b16 %v1803, %v1802
        %v1807 = vpack.c.b16 %v1805, %v1804
        %v1811 = vsel %vm610, %v1786, 0
        %1813 = vmatprep.subr.bf16.mxu0 0
        %1814 = vmatpush1.bf16.msra.mxu0 %v1806
        %1815 = vmatprep.subr.bf16.mxu0 0
        %1816 = vmatpush1.bf16.msra.mxu0 %v1807
        %1817 = vmatprep.subr.bf16.mxu0 0
        %1818 = vmatpush1.bf16.msra.mxu0 0
        %1819 = vmatprep.subr.bf16.mxu0 0
        %1820 = vmatpush1.bf16.msra.mxu0 0
        %1821 = vmatprep.subr.bf16.mxu0 0
        %1822 = vmatpush1.bf16.msra.mxu0 0
        %1823 = vmatprep.subr.bf16.mxu0 0
        %1824 = vmatpush1.bf16.msra.mxu0 0
        %1825 = vmatprep.subr.bf16.mxu0 0
        %1826 = vmatpush1.bf16.msra.mxu0 0
        %1827 = vmatprep.subr.bf16.mxu0 0
        %1828 = vmatpush1.bf16.msra.mxu0 0
        %1829 = vmatprep.subr.bf16.mxu0 0
        %1830 = vmatpush1.bf16.msra.mxu0 0
        %1831 = vmatprep.subr.bf16.mxu0 0
        %1832 = vmatpush1.bf16.msra.mxu0 0
        %1833 = vmatprep.subr.bf16.mxu0 0
        %1834 = vmatpush1.bf16.msra.mxu0 0
        %1835 = vmatprep.subr.bf16.mxu0 0
        %1836 = vmatpush1.bf16.msra.mxu0 0
        %1837 = vmatprep.subr.bf16.mxu0 0
        %1838 = vmatpush1.bf16.msra.mxu0 0
        %1839 = vmatprep.subr.bf16.mxu0 0
        %1840 = vmatpush1.bf16.msra.mxu0 0
        %1841 = vmatprep.subr.bf16.mxu0 0
        %1842 = vmatpush1.bf16.msra.mxu0 0
        %1843 = vmatprep.subr.bf16.mxu0 0
        %1844 = vmatpush1.bf16.msra.mxu0 0
        %1845 = vmatprep.mubr.bf16.mxu0 0
        %1846 = vmatmul.mubr.bf16.gmra.mrb[0].mxu0 %v1811
        %v1847 = vpop.f32.mrb[0].mxu0
        %v1848 = vadd.f32 %v1796, %v1847
        %v1849 = vpop.f32.mrb[0].mxu0
        %v1850 = vpop.f32.mrb[0].mxu0
        %v1851 = vadd.f32 %v1796, %v1850
        %v1852 = vpop.f32.mrb[0].mxu0
        %1853 = vdwg.mxu0
        %v1854 = vmul.f32 %v1848, 0.5
        %v1855 = vmul.f32 %v1851, 0.5
        %v1856 = vmul.f32 %v1848, 0.70710677
        %v1857 = vmul.f32 %v1851, 0.70710677
        %v1858 = verf.f32.pop %v1856
        %v1859 = verf.f32.pop %v1857
        %v1860 = vadd.f32 %v1858, 1.0
        %v1861 = vadd.f32 %v1859, 1.0
        %v1862 = vmul.f32 %v1854, %v1860
        %v1863 = vmul.f32 %v1855, %v1861
        %v1864 = vpack.c.bf16 %v1863, %v1862
        %v1865 = vld [vmem:[%s593] sm:$0xf]
        %v1866 = vld [vmem:[%s593 + $0x4] sm:$0xf]
        %v1867 = vld [vmem:[%s593 + $0x8] sm:$0xf]
        %v1868 = vld [vmem:[%s593 + $0xc] sm:$0xf]
        %v1869 = vld [vmem:[%s593 + $0x10] sm:$0xf]
        %v1870 = vld [vmem:[%s593 + $0x14] sm:$0xf]
        %v1871 = vld [vmem:[%s593 + $0x18] sm:$0xf]
        %v1872 = vld [vmem:[%s593 + $0x1c] sm:$0xf]
        %v1873 = vld [vmem:[%s596] sm:$0x1]
        %v1875 = vlaneseq
        %v1876 = vshrl.u32 %v1875, 7
        %v1877 = vsub.s32 0, %v1876
        %v1878 = vrot.slane %v1873, %v1877
        %v1888 = vunpack.c.l.b16 %v1865
        %v1889 = vunpack.c.l.b16 %v1866
        %v1890 = vunpack.c.l.b16 %v1867
        %v1891 = vunpack.c.l.b16 %v1868
        %v1892 = vunpack.c.l.b16 %v1869
        %v1893 = vunpack.c.l.b16 %v1870
        %v1894 = vunpack.c.l.b16 %v1871
        %v1895 = vunpack.c.l.b16 %v1872
        %v1896 = vpack.c.b16 %v1889, %v1888
        %v1897 = vpack.c.b16 %v1891, %v1890
        %v1898 = vpack.c.b16 %v1893, %v1892
        %v1899 = vpack.c.b16 %v1895, %v1894
        %v1905 = vsel %vm1686, %v1864, 0
        %1907 = vmatprep.subr.bf16.mxu0 0
        %1908 = vmatpush1.bf16.msra.mxu0 %v1896
        %1909 = vmatprep.subr.bf16.mxu0 0
        %1910 = vmatpush1.bf16.msra.mxu0 %v1897
        %1911 = vmatprep.subr.bf16.mxu0 0
        %1912 = vmatpush1.bf16.msra.mxu0 %v1898
        %1913 = vmatprep.subr.bf16.mxu0 0
        %1914 = vmatpush1.bf16.msra.mxu0 %v1899
        %1915 = vmatprep.subr.bf16.mxu0 0
        %1916 = vmatpush1.bf16.msra.mxu0 0
        %1917 = vmatprep.subr.bf16.mxu0 0
        %1918 = vmatpush1.bf16.msra.mxu0 0
        %1919 = vmatprep.subr.bf16.mxu0 0
        %1920 = vmatpush1.bf16.msra.mxu0 0
        %1921 = vmatprep.subr.bf16.mxu0 0
        %1922 = vmatpush1.bf16.msra.mxu0 0
        %1923 = vmatprep.subr.bf16.mxu0 0
        %1924 = vmatpush1.bf16.msra.mxu0 0
        %1925 = vmatprep.subr.bf16.mxu0 0
        %1926 = vmatpush1.bf16.msra.mxu0 0
        %1927 = vmatprep.subr.bf16.mxu0 0
        %1928 = vmatpush1.bf16.msra.mxu0 0
        %1929 = vmatprep.subr.bf16.mxu0 0
        %1930 = vmatpush1.bf16.msra.mxu0 0
        %1931 = vmatprep.subr.bf16.mxu0 0
        %1932 = vmatpush1.bf16.msra.mxu0 0
        %1933 = vmatprep.subr.bf16.mxu0 0
        %1934 = vmatpush1.bf16.msra.mxu0 0
        %1935 = vmatprep.subr.bf16.mxu0 0
        %1936 = vmatpush1.bf16.msra.mxu0 0
        %1937 = vmatprep.subr.bf16.mxu0 0
        %1938 = vmatpush1.bf16.msra.mxu0 0
        %1939 = vmatprep.mubr.bf16.mxu0 0
        %1940 = vmatmul.mubr.bf16.gmra.mrb[0].mxu0 %v1905
        %v1941 = vpop.f32.mrb[0].mxu0
        %v1942 = vadd.f32 %v1878, %v1941
        %v1943 = vpop.f32.mrb[0].mxu0
        %v1944 = vpop.f32.mrb[0].mxu0
        %v1945 = vadd.f32 %v1878, %v1944
        %v1946 = vpop.f32.mrb[0].mxu0
        %1947 = vdwg.mxu0
        %v1948 = vadd.f32 %v1740, %v1942
        %v1949 = vadd.f32 %v1741, %v1945
        %1950 = vst.msk [vmem:[#allocation2] sm:$0xff] %vm610, %v1948
        %1951 = vst.msk [vmem:[#allocation2 + $0x8] sm:$0xff] %vm610, %v1949
        // Predicated region
        $region73: #{tpu_custom_call.1} parent=67 // pred_check
          %p1952 = pneg %p366
        $region74: #{tpu_custom_call.1} parent=67 // pred_check_branch
          %1954 = sbr.rel (%p1952) target = $region76
        $region75: #{tpu_custom_call.1} parent=67 // pred_region
          %s1955 = smul.u32 2, %s28
          %s1957 = ssub.s32 256, 256
          %1958 = vsyncadd [#allocation3], %s1957
          %s1959 = smul.addr %s1955, 128
          %s1960 = scalar_lea.hbm %s12, %s1959
          %s1961 = sshll.u32 [#allocation2], 4
          %s1962 = int_to_ptr.vmem [resolvable:$true] %s1961
          %1967 = dma.vmem_to_hbm [thread:$0]  %s1962, 256, %s1960, [#allocation3], 128, 128, 8
        $region76: #{tpu_custom_call.1} parent=67 // pred_fallthru
          _
        // Predicated region
        $region77: #{tpu_custom_call.1} parent=67 // pred_check
          %p1968 = pneg %p366
        $region78: #{tpu_custom_call.1} parent=67 // pred_check_branch
          %1970 = sbr.rel (%p1968) target = $region80
        $region79: #{tpu_custom_call.1} parent=67 // pred_region
          %1971 = dma.done [#allocation3], 256
        $region80: #{tpu_custom_call.1} parent=67 // pred_fallthru
          _
      $region68: #{tpu_custom_call.1} parent=5 // pred_fallthru
        _
      %p1972 = scmp.le.s32.totalorder 2, %s19
      // Predicated region
      $region81: #{tpu_custom_call.1} parent=5 // pred_check
        %p1973 = pneg %p1972
      $region82: #{tpu_custom_call.1} parent=5 // pred_check_branch
        %1975 = sbr.rel (%p1973) target = $region84
      $region83: #{tpu_custom_call.1} parent=5 // pred_region
        %s1976 = ssub.s32 %s19, 2
      $region84: #{tpu_custom_call.1} parent=5 // pred_fallthru
        _
    $region6: #{tpu_custom_call.1} parent=1 // loop_footer
      %s23 = sadd.s32 1, %s19
    $region7: #{tpu_custom_call.1} parent=1 // loop_footer_branch
      %18 = sbr.rel target = $region3
    $region8: #{tpu_custom_call.1} parent=1 // loop_exit
      _
    %1977 = vsyncpa [#allocation3], 1
    %s1978 = scalar_lea.sflag [#allocation3], 1
    %1979 = vsyncpa %s1978, 1

</llo_original>
